<compile_context>
chip_gen: v7x
topology: tpu7x:2x2x1
jax: 0.10.0
libtpu: 0.0.40
codegen_flags: <defaults>
</compile_context>

<pallas_src>
import numpy as np
import jax
import jax.numpy as jnp
from jax.experimental import pallas as pl
from jax.experimental.pallas import tpu as pltpu


def _round_up(a, m):
    return (a + m - 1) // m * m


# ---------------------------------------------------------------------------
# Kernel: one block of B samples, whole network = 4 bf16 matmuls (f32 acc)
# ---------------------------------------------------------------------------
def cnn2d_kernel(x_ref, w1_ref, b1_ref, w2_ref, b2_ref,
                 wf1_ref, bf1_ref, wf2_ref, bf2_ref, out_ref):
    x = x_ref[...]                                                   # (B, 48) bf16

    # conv1 + folded BN1: all 16 output positions in ONE bf16 matmul, columns
    # grouped [intra-window offset t][pool window w][cout] so MaxPool2d(2,2)
    # is a max over four aligned 384-lane slices.  Pool BEFORE bias/LeakyReLU
    # (exact: bias is shared per window, LeakyReLU is monotone).
    a = jnp.dot(x, w1_ref[...], preferred_element_type=jnp.float32)  # (B, 1536) f32
    q = w1_ref.shape[1] // 4
    m = jnp.maximum(jnp.maximum(a[:, 0:q], a[:, q:2 * q]),
                    jnp.maximum(a[:, 2 * q:3 * q], a[:, 3 * q:4 * q]))
    p1 = m + b1_ref[...]                                             # (B, 384) f32
    p1 = jnp.maximum(p1, 0.01 * p1)                                  # LeakyReLU(0.01)
    # Dropout(0.3): identity in eval mode.

    # conv2 + folded BN2 on the 2x2 pooled map (pad=1): every (out-pos, in-pos)
    # pair uses exactly one 3x3 tap -> ONE bf16 matmul with per-position output
    # channels zero-padded to 256 lanes.  Pool FIRST (exact, same argument),
    # then bias + LeakyReLU on only (B, 256).
    y2 = jnp.dot(p1.astype(jnp.bfloat16), w2_ref[...],
                 preferred_element_type=jnp.float32)                 # (B, 1024) f32
    s = w2_ref.shape[1] // 4
    h = jnp.maximum(jnp.maximum(y2[:, 0:s], y2[:, s:2 * s]),
                    jnp.maximum(y2[:, 2 * s:3 * s], y2[:, 3 * s:4 * s]))  # (B, 256)
    h = h + b2_ref[...]
    h = jnp.maximum(h, 0.01 * h)                                     # LeakyReLU(0.01)
    # Dropout(0.3): identity in eval mode.  Flatten of (C2,1,1) is just channels.

    r = jnp.dot(h.astype(jnp.bfloat16), wf1_ref[...],
                preferred_element_type=jnp.float32) + bf1_ref[...]   # (B, 128) f32
    r = jnp.maximum(r, 0.0)                                          # ReLU(fc1)
    out_ref[...] = jnp.dot(r.astype(jnp.bfloat16), wf2_ref[...],
                           preferred_element_type=jnp.float32) + bf2_ref[...]  # (B, 8)


# ---------------------------------------------------------------------------
# One-time host-side parameter re-layout (+ eval-mode BN folding, bf16 weights)
# ---------------------------------------------------------------------------
def prepare_params(params, eps=1e-5):
    (w1, b1, g1, be1, rm1, rv1,
     w2, b2, g2, be2, rm2, rv2,
     wfc1, bfc1, wfc2, bfc2) = [np.asarray(jax.device_get(p), np.float32)
                                for p in params]

    # Fold eval-mode BatchNorm into the preceding conv (conv is linear).
    s1 = g1 / np.sqrt(rv1 + eps)
    w1f = w1 * s1[:, None, None, None]
    b1f = (b1 - rm1) * s1 + be1
    s2 = g2 / np.sqrt(rv2 + eps)
    w2f = w2 * s2[:, None, None, None]
    b2f = (b2 - rm2) * s2 + be2

    C1, Cin = w1f.shape[0], w1f.shape[1]          # 96, 3
    C2 = w2f.shape[0]                             # 192
    F1, Nout = wfc1.shape[0], wfc2.shape[0]       # 96, 4

    # conv1 as one dense matmul from the raw flattened sample (Cin*4*4=48) to
    # all 16 conv1 outputs, columns ordered [offset t][window w][cout].
    W1 = np.zeros((Cin * 16, 16 * C1), np.float32)
    for t in range(4):
        ti, tj = t // 2, t % 2
        for w in range(4):
            wi, wj = w // 2, w % 2
            r, c = 2 * wi + ti, 2 * wj + tj       # conv1 output position on 4x4
            col = t * (4 * C1) + w * C1
            for kh in range(3):
                ri = r + kh - 1
                if not (0 <= ri < 4):
                    continue
                for kw in range(3):
                    ci = c + kw - 1
                    if not (0 <= ci < 4):
                        continue
                    for cin in range(Cin):
                        row = cin * 16 + ri * 4 + ci
                        W1[row, col:col + C1] += w1f[:, cin, kh, kw]
    b1big = np.tile(b1f, 4)[None, :]              # (1, 4*C1): bias per window

    # conv2 (3x3, pad=1) on the 2x2 pooled map, output channels padded to CP.
    CP = _round_up(C2, 128)                       # 256
    W2 = np.zeros((4 * C1, 4 * CP), np.float32)
    for o in range(4):
        oi, oj = o // 2, o % 2
        for p in range(4):
            pi, pj = p // 2, p % 2
            kh, kw = pi - oi + 1, pj - oj + 1     # always in [0,2] on a 2x2 map
            W2[p * C1:(p + 1) * C1, o * CP:o * CP + C2] = w2f[:, :, kh, kw].T
    # Bias is applied AFTER the in-kernel pool, so it is only (1, CP).
    b2small = np.zeros((1, CP), np.float32)
    b2small[0, :C2] = b2f

    # fc1 (C2 -> F1), zero-padded to (CP -> F1P); fc2 (F1 -> Nout) padded only
    # to 8 output lanes (dense narrow output, cuts writeback 16x vs 128 lanes).
    F1P = _round_up(F1, 128)                      # 128
    OUTP = _round_up(Nout, 8)                     # 8
    WF1 = np.zeros((CP, F1P), np.float32)
    WF1[:C2, :F1] = wfc1.T
    BF1 = np.zeros((1, F1P), np.float32)
    BF1[0, :F1] = bfc1
    WF2 = np.zeros((F1P, OUTP), np.float32)
    WF2[:F1, :Nout] = wfc2.T
    BF2 = np.zeros((1, OUTP), np.float32)
    BF2[0, :Nout] = bfc2

    # Matmul operands in bf16 (MXU-native on v5e/v6e/v7x); biases stay f32.
    return (jnp.asarray(W1, jnp.bfloat16), jnp.asarray(b1big, jnp.float32),
            jnp.asarray(W2, jnp.bfloat16), jnp.asarray(b2small, jnp.float32),
            jnp.asarray(WF1, jnp.bfloat16), jnp.asarray(BF1, jnp.float32),
            jnp.asarray(WF2, jnp.bfloat16), jnp.asarray(BF2, jnp.float32))


# ---------------------------------------------------------------------------
# Wrapper: batched pallas_call
# ---------------------------------------------------------------------------
def cnn2d_forward(x_nchw, packed, block_b=1024, n_out=4):
    """x_nchw: (N, 3, 4, 4) float32 (torch NCHW). Returns (N, n_out) f32 logits."""
    W1, b1, W2, b2, WF1, BF1, WF2, BF2 = packed
    N, Cin, Hh, Ww = x_nchw.shape
    assert (Cin, Hh, Ww) == (3, 4, 4), "CNN_2D's Linear(2*hidden, ...) implies 3x4x4 input"

    # Contiguous lane-dense (N, 48) input slab, bf16 for the MXU.
    x_flat = x_nchw.reshape(N, Cin * Hh * Ww).astype(jnp.bfloat16)

    # Block size: big (amortizes ~0.35 us/step pipeline overhead) but capped at
    # ceil(N/2) so the grid has >=2 steps whenever possible -> both v7x
    # TensorCores get work via dimension_semantics=("parallel",).
    SUB = 16                                       # bf16 sublane-friendly multiple
    half = _round_up((N + 1) // 2, SUB)
    B = max(SUB, _round_up(min(block_b, half), SUB))
    Np = _round_up(N, B)
    if Np != N:
        x_flat = jnp.pad(x_flat, ((0, Np - N), (0, 0)))

    out = pl.pallas_call(
        cnn2d_kernel,
        out_shape=jax.ShapeDtypeStruct((Np, WF2.shape[1]), jnp.float32),
        grid_spec=pltpu.PrefetchScalarGridSpec(
            num_scalar_prefetch=0,
            grid=(Np // B,),                                         # B samples per step
            in_specs=[
                pl.BlockSpec((B, x_flat.shape[1]), lambda n: (n, 0)),  # x slab (bf16)
                pl.BlockSpec(W1.shape, lambda n: (0, 0)),              # conv1 (BN folded)
                pl.BlockSpec(b1.shape, lambda n: (0, 0)),
                pl.BlockSpec(W2.shape, lambda n: (0, 0)),              # conv2 (BN folded)
                pl.BlockSpec(b2.shape, lambda n: (0, 0)),
                pl.BlockSpec(WF1.shape, lambda n: (0, 0)),             # fc1 (padded)
                pl.BlockSpec(BF1.shape, lambda n: (0, 0)),
                pl.BlockSpec(WF2.shape, lambda n: (0, 0)),             # fc2 (narrow)
                pl.BlockSpec(BF2.shape, lambda n: (0, 0)),
            ],
            out_specs=pl.BlockSpec((B, WF2.shape[1]), lambda n: (n, 0)),
        ),
        compiler_params=pltpu.CompilerParams(
            dimension_semantics=("parallel",),                       # megacore-friendly
            vmem_limit_bytes=48 * 1024 * 1024,                       # covers B<=2048 sweeps
        ),
    )(x_flat, W1, b1, W2, b2, WF1, BF1, WF2, BF2)
    return out[:N, :n_out]


# ---------------------------------------------------------------------------
# Pure-JAX reference (torch NCHW eval-mode semantics) for validation
# ---------------------------------------------------------------------------
def reference_forward(x, params):
    (w1, b1, g1, be1, rm1, rv1,
     w2, b2, g2, be2, rm2, rv2,
     wfc1, bfc1, wfc2, bfc2) = params
    hp = jax.lax.Precision.HIGHEST

    def conv(x, w, b):
        y = jax.lax.conv_general_dilated(
            x, w, window_strides=(1, 1), padding=((1, 1), (1, 1)),
            dimension_numbers=('NCHW', 'OIHW', 'NCHW'), precision=hp)
        return y + b[None, :, None, None]

    def bn(x, g, be, rm, rv):
        inv = jax.lax.rsqrt(rv + 1e-5)
        return (x - rm[None, :, None, None]) * (g * inv)[None, :, None, None] \
            + be[None, :, None, None]

    def leaky(x):
        return jnp.where(x > 0, x, 0.01 * x)

    def pool(x):
        N, C, H, W = x.shape
        return x.reshape(N, C, H // 2, 2, W // 2, 2).max(axis=(3, 5))

    y = pool(leaky(bn(conv(x, w1, b1), g1, be1, rm1, rv1)))
    y = pool(leaky(bn(conv(y, w2, b2), g2, be2, rm2, rv2)))
    y = y.reshape(y.shape[0], -1)                      # torch Flatten
    y = jnp.maximum(jnp.dot(y, wfc1.T, precision=hp) + bfc1, 0.0)
    return jnp.dot(y, wfc2.T, precision=hp) + bfc2


# ---------------------------------------------------------------------------
if __name__ == "__main__":
    key = jax.random.PRNGKey(0)
    ks = jax.random.split(key, 17)
    Hs = 96

    def uinit(k, shape, fan_in):
        b = 1.0 / np.sqrt(fan_in)
        return jax.random.uniform(k, shape, jnp.float32, -b, b)

    # Deterministic synthetic parameters (shapes from CNN_2D.__init__).
    w1 = uinit(ks[0], (Hs, 3, 3, 3), 3 * 9)
    b1 = uinit(ks[1], (Hs,), 3 * 9)
    g1 = jax.random.uniform(ks[2], (Hs,), jnp.float32, 0.5, 1.5)
    be1 = 0.1 * jax.random.normal(ks[3], (Hs,), jnp.float32)
    rm1 = 0.1 * jax.random.normal(ks[4], (Hs,), jnp.float32)
    rv1 = jax.random.uniform(ks[5], (Hs,), jnp.float32, 0.5, 1.5)
    w2 = uinit(ks[6], (2 * Hs, Hs, 3, 3), Hs * 9)
    b2 = uinit(ks[7], (2 * Hs,), Hs * 9)
    g2 = jax.random.uniform(ks[8], (2 * Hs,), jnp.float32, 0.5, 1.5)
    be2 = 0.1 * jax.random.normal(ks[9], (2 * Hs,), jnp.float32)
    rm2 = 0.1 * jax.random.normal(ks[10], (2 * Hs,), jnp.float32)
    rv2 = jax.random.uniform(ks[11], (2 * Hs,), jnp.float32, 0.5, 1.5)
    wfc1 = uinit(ks[12], (Hs, 2 * Hs), 2 * Hs)
    bfc1 = uinit(ks[13], (Hs,), 2 * Hs)
    wfc2 = uinit(ks[14], (4, Hs), Hs)
    bfc2 = uinit(ks[15], (4,), Hs)
    params = (w1, b1, g1, be1, rm1, rv1, w2, b2, g2, be2, rm2, rv2,
              wfc1, bfc1, wfc2, bfc2)

    # Input: batch=20, channels=3, spatial 4x4 (fixed by Linear(2*hidden, ...)).
    x = jax.random.normal(ks[16], (20, 3, 4, 4), jnp.float32)

    packed = prepare_params(params)

    # N=20 -> B=16, grid=2 (exercises padding + multi-step parallel grid);
    # N=10 -> B=16, grid=1 (single-block path).
    out_a = jax.block_until_ready(cnn2d_forward(x, packed))
    out_b = jax.block_until_ready(cnn2d_forward(x[:10], packed))
    ref = jax.block_until_ready(reference_forward(x, params))

    err = max(float(jnp.max(jnp.abs(out_a - ref))),
              float(jnp.max(jnp.abs(out_b - ref[:10]))))
    assert out_a.shape == (20, 4), out_a.shape
    assert out_b.shape == (10, 4), out_b.shape
    assert err < 5e-2, f"kernel/reference mismatch: max abs err = {err}"
    print("KERNEL_OK")
</pallas_src>

<mosaic_0001>
module attributes {stable_mosaic.version = 11 : i64} {
  func.func @cnn2d_kernel(%arg0: i32, %arg1: memref<16x48xbf16, #tpu.memory_space<vmem>>, %arg2: memref<48x1536xbf16, #tpu.memory_space<vmem>>, %arg3: memref<1x384xf32, #tpu.memory_space<vmem>>, %arg4: memref<384x1024xbf16, #tpu.memory_space<vmem>>, %arg5: memref<1x256xf32, #tpu.memory_space<vmem>>, %arg6: memref<256x128xbf16, #tpu.memory_space<vmem>>, %arg7: memref<1x128xf32, #tpu.memory_space<vmem>>, %arg8: memref<128x8xbf16, #tpu.memory_space<vmem>>, %arg9: memref<1x8xf32, #tpu.memory_space<vmem>>, %arg10: memref<16x8xf32, #tpu.memory_space<vmem>>) attributes {dimension_semantics = [#tpu.dimension_semantics<parallel>], iteration_bounds = array<i64: 2>, scalar_prefetch = 0 : i64, scratch_operands = 0 : i64, tpu.core_type = #tpu.core_type<tc>, window_params = [{transform_indices = @transform_0, window_bounds = array<i64: 16, 48>}, {pipeline_mode = #tpu.pipeline_mode<synchronous>, transform_indices = @transform_1, window_bounds = array<i64: 48, 1536>}, {pipeline_mode = #tpu.pipeline_mode<synchronous>, transform_indices = @transform_2, window_bounds = array<i64: 1, 384>}, {pipeline_mode = #tpu.pipeline_mode<synchronous>, transform_indices = @transform_3, window_bounds = array<i64: 384, 1024>}, {pipeline_mode = #tpu.pipeline_mode<synchronous>, transform_indices = @transform_4, window_bounds = array<i64: 1, 256>}, {pipeline_mode = #tpu.pipeline_mode<synchronous>, transform_indices = @transform_5, window_bounds = array<i64: 256, 128>}, {pipeline_mode = #tpu.pipeline_mode<synchronous>, transform_indices = @transform_6, window_bounds = array<i64: 1, 128>}, {pipeline_mode = #tpu.pipeline_mode<synchronous>, transform_indices = @transform_7, window_bounds = array<i64: 128, 8>}, {pipeline_mode = #tpu.pipeline_mode<synchronous>, transform_indices = @transform_8, window_bounds = array<i64: 1, 8>}, {transform_indices = @transform_9, window_bounds = array<i64: 16, 8>}]} {
    %c0 = arith.constant 0 : index
    %c0_0 = arith.constant 0 : index
    %0 = vector.load %arg1[%c0, %c0_0] : memref<16x48xbf16, #tpu.memory_space<vmem>>, vector<16x48xbf16>
    %c0_1 = arith.constant 0 : index
    %c0_2 = arith.constant 0 : index
    %1 = vector.load %arg2[%c0_1, %c0_2] : memref<48x1536xbf16, #tpu.memory_space<vmem>>, vector<48x1536xbf16>
    %cst = arith.constant dense<0.000000e+00> : vector<16x1536xf32>
    %2 = tpu.matmul %0, %1, %cst {dimension_numbers = #tpu.dot_dimension_numbers<[1], [0], [0], [1], [0, 0, 1, 1], [], []>} : vector<16x48xbf16>, vector<48x1536xbf16>, vector<16x1536xf32> -> vector<16x1536xf32>
    %3 = vector.extract_strided_slice %2 {offsets = [0, 0], sizes = [16, 384], strides = [1, 1]} : vector<16x1536xf32> to vector<16x384xf32>
    %4 = vector.extract_strided_slice %2 {offsets = [0, 384], sizes = [16, 384], strides = [1, 1]} : vector<16x1536xf32> to vector<16x384xf32>
    %5 = arith.maximumf %3, %4 : vector<16x384xf32>
    %6 = vector.extract_strided_slice %2 {offsets = [0, 768], sizes = [16, 384], strides = [1, 1]} : vector<16x1536xf32> to vector<16x384xf32>
    %7 = vector.extract_strided_slice %2 {offsets = [0, 1152], sizes = [16, 384], strides = [1, 1]} : vector<16x1536xf32> to vector<16x384xf32>
    %8 = arith.maximumf %6, %7 : vector<16x384xf32>
    %9 = arith.maximumf %5, %8 : vector<16x384xf32>
    %c0_3 = arith.constant 0 : index
    %c0_4 = arith.constant 0 : index
    %10 = vector.load %arg3[%c0_3, %c0_4] : memref<1x384xf32, #tpu.memory_space<vmem>>, vector<1x384xf32>
    %11 = vector.broadcast %10 : vector<1x384xf32> to vector<16x384xf32>
    %12 = arith.addf %9, %11 : vector<16x384xf32>
    %cst_5 = arith.constant 0.00999999977 : f32
    %13 = vector.broadcast %cst_5 : f32 to vector<16x384xf32>
    %14 = arith.mulf %13, %12 : vector<16x384xf32>
    %15 = arith.maximumf %12, %14 : vector<16x384xf32>
    %16 = arith.truncf %15 : vector<16x384xf32> to vector<16x384xbf16>
    %c0_6 = arith.constant 0 : index
    %c0_7 = arith.constant 0 : index
    %17 = vector.load %arg4[%c0_6, %c0_7] : memref<384x1024xbf16, #tpu.memory_space<vmem>>, vector<384x1024xbf16>
    %cst_8 = arith.constant dense<0.000000e+00> : vector<16x1024xf32>
    %18 = tpu.matmul %16, %17, %cst_8 {dimension_numbers = #tpu.dot_dimension_numbers<[1], [0], [0], [1], [0, 0, 1, 1], [], []>} : vector<16x384xbf16>, vector<384x1024xbf16>, vector<16x1024xf32> -> vector<16x1024xf32>
    %19 = vector.extract_strided_slice %18 {offsets = [0, 0], sizes = [16, 256], strides = [1, 1]} : vector<16x1024xf32> to vector<16x256xf32>
    %20 = vector.extract_strided_slice %18 {offsets = [0, 256], sizes = [16, 256], strides = [1, 1]} : vector<16x1024xf32> to vector<16x256xf32>
    %21 = arith.maximumf %19, %20 : vector<16x256xf32>
    %22 = vector.extract_strided_slice %18 {offsets = [0, 512], sizes = [16, 256], strides = [1, 1]} : vector<16x1024xf32> to vector<16x256xf32>
    %23 = vector.extract_strided_slice %18 {offsets = [0, 768], sizes = [16, 256], strides = [1, 1]} : vector<16x1024xf32> to vector<16x256xf32>
    %24 = arith.maximumf %22, %23 : vector<16x256xf32>
    %25 = arith.maximumf %21, %24 : vector<16x256xf32>
    %c0_9 = arith.constant 0 : index
    %c0_10 = arith.constant 0 : index
    %26 = vector.load %arg5[%c0_9, %c0_10] : memref<1x256xf32, #tpu.memory_space<vmem>>, vector<1x256xf32>
    %27 = vector.broadcast %26 : vector<1x256xf32> to vector<16x256xf32>
    %28 = arith.addf %25, %27 : vector<16x256xf32>
    %cst_11 = arith.constant 0.00999999977 : f32
    %29 = vector.broadcast %cst_11 : f32 to vector<16x256xf32>
    %30 = arith.mulf %29, %28 : vector<16x256xf32>
    %31 = arith.maximumf %28, %30 : vector<16x256xf32>
    %32 = arith.truncf %31 : vector<16x256xf32> to vector<16x256xbf16>
    %c0_12 = arith.constant 0 : index
    %c0_13 = arith.constant 0 : index
    %33 = vector.load %arg6[%c0_12, %c0_13] : memref<256x128xbf16, #tpu.memory_space<vmem>>, vector<256x128xbf16>
    %cst_14 = arith.constant dense<0.000000e+00> : vector<16x128xf32>
    %34 = tpu.matmul %32, %33, %cst_14 {dimension_numbers = #tpu.dot_dimension_numbers<[1], [0], [0], [1], [0, 0, 1, 1], [], []>} : vector<16x256xbf16>, vector<256x128xbf16>, vector<16x128xf32> -> vector<16x128xf32>
    %c0_15 = arith.constant 0 : index
    %c0_16 = arith.constant 0 : index
    %35 = vector.load %arg7[%c0_15, %c0_16] : memref<1x128xf32, #tpu.memory_space<vmem>>, vector<1x128xf32>
    %36 = vector.broadcast %35 : vector<1x128xf32> to vector<16x128xf32>
    %37 = arith.addf %34, %36 : vector<16x128xf32>
    %cst_17 = arith.constant 0.000000e+00 : f32
    %38 = vector.broadcast %cst_17 : f32 to vector<16x128xf32>
    %39 = arith.maximumf %37, %38 : vector<16x128xf32>
    %40 = arith.truncf %39 : vector<16x128xf32> to vector<16x128xbf16>
    %c0_18 = arith.constant 0 : index
    %c0_19 = arith.constant 0 : index
    %41 = vector.load %arg8[%c0_18, %c0_19] : memref<128x8xbf16, #tpu.memory_space<vmem>>, vector<128x8xbf16>
    %cst_20 = arith.constant dense<0.000000e+00> : vector<16x8xf32>
    %42 = tpu.matmul %40, %41, %cst_20 {dimension_numbers = #tpu.dot_dimension_numbers<[1], [0], [0], [1], [0, 0, 1, 1], [], []>} : vector<16x128xbf16>, vector<128x8xbf16>, vector<16x8xf32> -> vector<16x8xf32>
    %c0_21 = arith.constant 0 : index
    %c0_22 = arith.constant 0 : index
    %43 = vector.load %arg9[%c0_21, %c0_22] : memref<1x8xf32, #tpu.memory_space<vmem>>, vector<1x8xf32>
    %44 = vector.broadcast %43 : vector<1x8xf32> to vector<16x8xf32>
    %45 = arith.addf %42, %44 : vector<16x8xf32>
    %c0_23 = arith.constant 0 : index
    %c0_24 = arith.constant 0 : index
    %46 = vector.load %arg10[%c0_23, %c0_24] : memref<16x8xf32, #tpu.memory_space<vmem>>, vector<16x8xf32>
    tpu.vector_store %arg10[%c0_23, %c0_24], %45 {strides = array<i32>} : memref<16x8xf32, #tpu.memory_space<vmem>>, vector<16x8xf32>,
    return
  }
  func.func @transform_0(%arg0: i32) -> (i32, i32) {
    %c0_i32 = arith.constant 0 : i32
    %c0_i32_0 = arith.constant 0 : i32
    return %arg0, %c0_i32 : i32, i32
  }
  func.func @transform_1(%arg0: i32) -> (i32, i32) {
    %c0_i32 = arith.constant 0 : i32
    %c0_i32_0 = arith.constant 0 : i32
    %c0_i32_1 = arith.constant 0 : i32
    return %c0_i32, %c0_i32_0 : i32, i32
  }
  func.func @transform_2(%arg0: i32) -> (i32, i32) {
    %c0_i32 = arith.constant 0 : i32
    %c0_i32_0 = arith.constant 0 : i32
    %c0_i32_1 = arith.constant 0 : i32
    return %c0_i32, %c0_i32_0 : i32, i32
  }
  func.func @transform_3(%arg0: i32) -> (i32, i32) {
    %c0_i32 = arith.constant 0 : i32
    %c0_i32_0 = arith.constant 0 : i32
    %c0_i32_1 = arith.constant 0 : i32
    return %c0_i32, %c0_i32_0 : i32, i32
  }
  func.func @transform_4(%arg0: i32) -> (i32, i32) {
    %c0_i32 = arith.constant 0 : i32
    %c0_i32_0 = arith.constant 0 : i32
    %c0_i32_1 = arith.constant 0 : i32
    return %c0_i32, %c0_i32_0 : i32, i32
  }
  func.func @transform_5(%arg0: i32) -> (i32, i32) {
    %c0_i32 = arith.constant 0 : i32
    %c0_i32_0 = arith.constant 0 : i32
    %c0_i32_1 = arith.constant 0 : i32
    return %c0_i32, %c0_i32_0 : i32, i32
  }
  func.func @transform_6(%arg0: i32) -> (i32, i32) {
    %c0_i32 = arith.constant 0 : i32
    %c0_i32_0 = arith.constant 0 : i32
    %c0_i32_1 = arith.constant 0 : i32
    return %c0_i32, %c0_i32_0 : i32, i32
  }
  func.func @transform_7(%arg0: i32) -> (i32, i32) {
    %c0_i32 = arith.constant 0 : i32
    %c0_i32_0 = arith.constant 0 : i32
    %c0_i32_1 = arith.constant 0 : i32
    return %c0_i32, %c0_i32_0 : i32, i32
  }
  func.func @transform_8(%arg0: i32) -> (i32, i32) {
    %c0_i32 = arith.constant 0 : i32
    %c0_i32_0 = arith.constant 0 : i32
    %c0_i32_1 = arith.constant 0 : i32
    return %c0_i32, %c0_i32_0 : i32, i32
  }
  func.func @transform_9(%arg0: i32) -> (i32, i32) {
    %c0_i32 = arith.constant 0 : i32
    %c0_i32_0 = arith.constant 0 : i32
    return %arg0, %c0_i32 : i32, i32
  }
}

</mosaic_0001>

<llo_original>
// kernel: tpu_custom_call.1
$region0: #{tpu_custom_call.1}
  #allocation0 [shape = 'u32[]', space=smem, size = 0x4, offset = 0x4, fixed_abs, tag = 'smem constant byte address 0x4 - core index']
  #allocation1 [shape = 'u32[144,128]{1,0:T(1,128)}', space=vmem, size = 0x12000, scoped, tag = 'internal scratch']
  %s0 = inlined_call_operand.vmem [shape: bf16[32,48], index: 0, kind: input, shape index: {}]
  %s1 = inlined_call_operand.hbm [shape: bf16[48,1536], index: 1, kind: input, shape index: {}]
  %s2 = inlined_call_operand.vmem [shape: f32[1,384], index: 2, kind: input, shape index: {}]
  %s3 = inlined_call_operand.hbm [shape: bf16[384,1024], index: 3, kind: input, shape index: {}]
  %s4 = inlined_call_operand.vmem [shape: f32[1,256], index: 4, kind: input, shape index: {}]
  %s5 = inlined_call_operand.hbm [shape: bf16[256,128], index: 5, kind: input, shape index: {}]
  %s6 = inlined_call_operand.vmem [shape: f32[1,128], index: 6, kind: input, shape index: {}]
  %s7 = inlined_call_operand.vmem [shape: bf16[128,8], index: 7, kind: input, shape index: {}]
  %s8 = inlined_call_operand.vmem [shape: f32[1,8], index: 8, kind: input, shape index: {}]
  %s9 = inlined_call_operand.vmem [shape: f32[32,8], index: 9, kind: output, shape index: {}]
  %s10 = sld [smem:[#allocation0]]
  $region81: #{tpu_custom_call.1} parent=0
    _
  %s12 = ssub.s32 1, %s10
  %s13 = scalar_select 0, %s12, %s10
  $region1: #{tpu_custom_call.1} parent=0
    #allocation2 [shape = 'u8[147456]{0}', space=vmem, size = 0x24000, scoped, tag = 'input window, operand 1, single buffered']
    #allocation3 [shape = 's32[2]{0}', space=sflag, size = 0x8, scoped, tag = 'scoped memory for tpu_custom_call.1']
    #allocation4 [shape = 'u8[786432]{0}', space=vmem, size = 0xc0000, scoped, tag = 'input window, operand 3, single buffered']
    #allocation5 [shape = 's32[1]{0}', space=sflag, size = 0x4, scoped, tag = 'scoped memory for tpu_custom_call.1']
    #allocation6 [shape = 'u8[65536]{0}', space=vmem, size = 0x10000, scoped, tag = 'input window, operand 5, single buffered']
    %14 = vsyncpa [#allocation3], 0
    %15 = vsyncpa [#allocation5], 0
    loop: start=0, step=1, limit=4
    $region2: #{tpu_custom_call.1} parent=1 // loop_pre_header
      _
    $region3: #{tpu_custom_call.1} parent=1 // loop_header
      %s17 = sphi 0, %s21
      %p18 = scmp.ge.s32.totalorder %s17, 4
      %s27 = sphi 0, %s29
      %s30 = sphi 0, %s27
      %s31 = sphi 0, %s30
      %s47 = sphi 0, %s31
      %s51 = sphi 0, %s51
      %s53 = sphi 0, %s51
      %s54 = sphi 0, %s53
      %s68 = sphi 0, %s54
      %s72 = sphi 0, %s72
      %s74 = sphi 0, %s72
      %s75 = sphi 0, %s74
      %s89 = sphi 0, %s75
      %s93 = sphi 0, %s93
      %s95 = sphi 0, %s93
      %s96 = sphi 0, %s95
      %s110 = sphi 0, %s96
      %s114 = sphi 0, %s114
      %s116 = sphi 0, %s114
      %s117 = sphi 0, %s116
      %s131 = sphi 0, %s117
      %s135 = sphi 0, %s135
      %s137 = sphi 0, %s135
      %s138 = sphi 0, %s137
      %s152 = sphi 0, %s138
      %s156 = sphi 0, %s156
      %s158 = sphi 0, %s156
      %s159 = sphi 0, %s158
      %s173 = sphi 0, %s159
      %s177 = sphi 0, %s177
      %s179 = sphi 0, %s177
      %s180 = sphi 0, %s179
      %s194 = sphi 0, %s180
      %s198 = sphi 0, %s198
      %s200 = sphi 0, %s198
      %s201 = sphi 0, %s200
      %s215 = sphi 0, %s201
      %s221 = sphi 0, %s223
      %s224 = sphi 0, %s221
      %s225 = sphi 0, %s224
      %s241 = sphi 0, %s225
    $region4: #{tpu_custom_call.1} parent=1 // loop_header_branch
      %20 = sbr.rel (%p18) target = $region8
    $region5: #{tpu_custom_call.1} parent=1 // loop_body
      %s22 = ssub.s32 %s17, 1
      %s23 = ssub.s32 %s17, 2
      %s24 = sadd.s32 %s17, 1
      %s25 = ssub.s32 %s17, %s24
      %p26 = scmp.eq.s32.totalorder %s25, 0
      %s28 = sadd.s32 %s27, 1
      %s29 = scalar_select %p26, %s27, %s28
      %p32 = pneg %p26
      %p33 = scmp.eq.s32.totalorder %s17, 1
      %p34 = por %p32, %p33
      %p35 = scmp.ne.s32.totalorder %s27, %s30
      %p36 = scmp.eq.s32.totalorder %s17, 0
      %p37 = por %p35, %p36
      %p38 = scmp.ne.s32.totalorder %s27, %s30
      %p39 = scmp.eq.s32.totalorder %s22, 1
      %p40 = por %p38, %p39
      %p41 = scmp.ne.s32.totalorder %s30, %s31
      %p42 = scmp.eq.s32.totalorder %s22, 0
      %p43 = por %p41, %p42
      %p44 = scmp.ne.s32.totalorder %s30, %s31
      %p45 = scmp.eq.s32.totalorder %s23, 1
      %p46 = por %p44, %p45
      %p48 = scmp.ne.s32.totalorder %s31, %s47
      %p49 = scmp.eq.s32.totalorder %s23, 0
      %p50 = por %p48, %p49
      %s52 = sadd.s32 %s51, 1
      %p55 = scmp.eq.s32.totalorder %s17, 1
      %p56 = scmp.ne.s32.totalorder %s51, %s53
      %p57 = scmp.eq.s32.totalorder %s17, 0
      %p58 = por %p56, %p57
      %p59 = scmp.ne.s32.totalorder %s51, %s53
      %p60 = scmp.eq.s32.totalorder %s22, 1
      %p61 = por %p59, %p60
      %p62 = scmp.ne.s32.totalorder %s53, %s54
      %p63 = scmp.eq.s32.totalorder %s22, 0
      %p64 = por %p62, %p63
      %p65 = scmp.ne.s32.totalorder %s53, %s54
      %p66 = scmp.eq.s32.totalorder %s23, 1
      %p67 = por %p65, %p66
      %p69 = scmp.ne.s32.totalorder %s54, %s68
      %p70 = scmp.eq.s32.totalorder %s23, 0
      %p71 = por %p69, %p70
      %s73 = sadd.s32 %s72, 1
      %p76 = scmp.eq.s32.totalorder %s17, 1
      %p77 = scmp.ne.s32.totalorder %s72, %s74
      %p78 = scmp.eq.s32.totalorder %s17, 0
      %p79 = por %p77, %p78
      %p80 = scmp.ne.s32.totalorder %s72, %s74
      %p81 = scmp.eq.s32.totalorder %s22, 1
      %p82 = por %p80, %p81
      %p83 = scmp.ne.s32.totalorder %s74, %s75
      %p84 = scmp.eq.s32.totalorder %s22, 0
      %p85 = por %p83, %p84
      %p86 = scmp.ne.s32.totalorder %s74, %s75
      %p87 = scmp.eq.s32.totalorder %s23, 1
      %p88 = por %p86, %p87
      %p90 = scmp.ne.s32.totalorder %s75, %s89
      %p91 = scmp.eq.s32.totalorder %s23, 0
      %p92 = por %p90, %p91
      %s94 = sadd.s32 %s93, 1
      %p97 = scmp.eq.s32.totalorder %s17, 1
      %p98 = scmp.ne.s32.totalorder %s93, %s95
      %p99 = scmp.eq.s32.totalorder %s17, 0
      %p100 = por %p98, %p99
      %p101 = scmp.ne.s32.totalorder %s93, %s95
      %p102 = scmp.eq.s32.totalorder %s22, 1
      %p103 = por %p101, %p102
      %p104 = scmp.ne.s32.totalorder %s95, %s96
      %p105 = scmp.eq.s32.totalorder %s22, 0
      %p106 = por %p104, %p105
      %p107 = scmp.ne.s32.totalorder %s95, %s96
      %p108 = scmp.eq.s32.totalorder %s23, 1
      %p109 = por %p107, %p108
      %p111 = scmp.ne.s32.totalorder %s96, %s110
      %p112 = scmp.eq.s32.totalorder %s23, 0
      %p113 = por %p111, %p112
      %s115 = sadd.s32 %s114, 1
      %p118 = scmp.eq.s32.totalorder %s17, 1
      %p119 = scmp.ne.s32.totalorder %s114, %s116
      %p120 = scmp.eq.s32.totalorder %s17, 0
      %p121 = por %p119, %p120
      %p122 = scmp.ne.s32.totalorder %s114, %s116
      %p123 = scmp.eq.s32.totalorder %s22, 1
      %p124 = por %p122, %p123
      %p125 = scmp.ne.s32.totalorder %s116, %s117
      %p126 = scmp.eq.s32.totalorder %s22, 0
      %p127 = por %p125, %p126
      %p128 = scmp.ne.s32.totalorder %s116, %s117
      %p129 = scmp.eq.s32.totalorder %s23, 1
      %p130 = por %p128, %p129
      %p132 = scmp.ne.s32.totalorder %s117, %s131
      %p133 = scmp.eq.s32.totalorder %s23, 0
      %p134 = por %p132, %p133
      %s136 = sadd.s32 %s135, 1
      %p139 = scmp.eq.s32.totalorder %s17, 1
      %p140 = scmp.ne.s32.totalorder %s135, %s137
      %p141 = scmp.eq.s32.totalorder %s17, 0
      %p142 = por %p140, %p141
      %p143 = scmp.ne.s32.totalorder %s135, %s137
      %p144 = scmp.eq.s32.totalorder %s22, 1
      %p145 = por %p143, %p144
      %p146 = scmp.ne.s32.totalorder %s137, %s138
      %p147 = scmp.eq.s32.totalorder %s22, 0
      %p148 = por %p146, %p147
      %p149 = scmp.ne.s32.totalorder %s137, %s138
      %p150 = scmp.eq.s32.totalorder %s23, 1
      %p151 = por %p149, %p150
      %p153 = scmp.ne.s32.totalorder %s138, %s152
      %p154 = scmp.eq.s32.totalorder %s23, 0
      %p155 = por %p153, %p154
      %s157 = sadd.s32 %s156, 1
      %p160 = scmp.eq.s32.totalorder %s17, 1
      %p161 = scmp.ne.s32.totalorder %s156, %s158
      %p162 = scmp.eq.s32.totalorder %s17, 0
      %p163 = por %p161, %p162
      %p164 = scmp.ne.s32.totalorder %s156, %s158
      %p165 = scmp.eq.s32.totalorder %s22, 1
      %p166 = por %p164, %p165
      %p167 = scmp.ne.s32.totalorder %s158, %s159
      %p168 = scmp.eq.s32.totalorder %s22, 0
      %p169 = por %p167, %p168
      %p170 = scmp.ne.s32.totalorder %s158, %s159
      %p171 = scmp.eq.s32.totalorder %s23, 1
      %p172 = por %p170, %p171
      %p174 = scmp.ne.s32.totalorder %s159, %s173
      %p175 = scmp.eq.s32.totalorder %s23, 0
      %p176 = por %p174, %p175
      %s178 = sadd.s32 %s177, 1
      %p181 = scmp.eq.s32.totalorder %s17, 1
      %p182 = scmp.ne.s32.totalorder %s177, %s179
      %p183 = scmp.eq.s32.totalorder %s17, 0
      %p184 = por %p182, %p183
      %p185 = scmp.ne.s32.totalorder %s177, %s179
      %p186 = scmp.eq.s32.totalorder %s22, 1
      %p187 = por %p185, %p186
      %p188 = scmp.ne.s32.totalorder %s179, %s180
      %p189 = scmp.eq.s32.totalorder %s22, 0
      %p190 = por %p188, %p189
      %p191 = scmp.ne.s32.totalorder %s179, %s180
      %p192 = scmp.eq.s32.totalorder %s23, 1
      %p193 = por %p191, %p192
      %p195 = scmp.ne.s32.totalorder %s180, %s194
      %p196 = scmp.eq.s32.totalorder %s23, 0
      %p197 = por %p195, %p196
      %s199 = sadd.s32 %s198, 1
      %p202 = scmp.eq.s32.totalorder %s17, 1
      %p203 = scmp.ne.s32.totalorder %s198, %s200
      %p204 = scmp.eq.s32.totalorder %s17, 0
      %p205 = por %p203, %p204
      %p206 = scmp.ne.s32.totalorder %s198, %s200
      %p207 = scmp.eq.s32.totalorder %s22, 1
      %p208 = por %p206, %p207
      %p209 = scmp.ne.s32.totalorder %s200, %s201
      %p210 = scmp.eq.s32.totalorder %s22, 0
      %p211 = por %p209, %p210
      %p212 = scmp.ne.s32.totalorder %s200, %s201
      %p213 = scmp.eq.s32.totalorder %s23, 1
      %p214 = por %p212, %p213
      %p216 = scmp.ne.s32.totalorder %s201, %s215
      %p217 = scmp.eq.s32.totalorder %s23, 0
      %p218 = por %p216, %p217
      %s219 = ssub.s32 %s17, %s24
      %p220 = scmp.eq.s32.totalorder %s219, 0
      %s222 = sadd.s32 %s221, 1
      %s223 = scalar_select %p220, %s221, %s222
      %p226 = pneg %p220
      %p227 = scmp.eq.s32.totalorder %s17, 1
      %p228 = por %p226, %p227
      %p229 = scmp.ne.s32.totalorder %s221, %s224
      %p230 = scmp.eq.s32.totalorder %s17, 0
      %p231 = por %p229, %p230
      %p232 = scmp.ne.s32.totalorder %s221, %s224
      %p233 = scmp.eq.s32.totalorder %s22, 1
      %p234 = por %p232, %p233
      %p235 = scmp.ne.s32.totalorder %s224, %s225
      %p236 = scmp.eq.s32.totalorder %s22, 0
      %p237 = por %p235, %p236
      %p238 = scmp.ne.s32.totalorder %s224, %s225
      %p239 = scmp.eq.s32.totalorder %s23, 1
      %p240 = por %p238, %p239
      %p242 = scmp.ne.s32.totalorder %s225, %s241
      %p243 = scmp.eq.s32.totalorder %s23, 0
      %p244 = por %p242, %p243
      %p245 = scmp.le.s32.totalorder 1, %s17
      %p246 = scmp.lt.s32.totalorder %s17, 3
      %p247 = pnand %p245, %p246
      %p248 = pneg %p247
      // Predicated region
      $region9: #{tpu_custom_call.1} parent=5 // pred_check
        _
      $region10: #{tpu_custom_call.1} parent=5 // pred_check_branch
        %250 = sbr.rel (%p247) target = $region12
      $region11: #{tpu_custom_call.1} parent=5 // pred_region
        %s251 = ssub.s32 %s17, 1
        // Predicated region
        $region13: #{tpu_custom_call.1} parent=11 // pred_check
          %p252 = pneg %p64
        $region14: #{tpu_custom_call.1} parent=11 // pred_check_branch
          %254 = sbr.rel (%p252) target = $region16
        $region15: #{tpu_custom_call.1} parent=11 // pred_region
          %s256 = ssub.s32 4608, 4608
          %257 = vsyncadd [#allocation3], %s256
          %s258 = sshll.u32 [#allocation2], 4
          %s259 = int_to_ptr.vmem [resolvable:$true] %s258
          %264 = dma.hbm_to_vmem [thread:$0]  %s1, 4608, %s259, [#allocation3], 768, 768, 48
        $region16: #{tpu_custom_call.1} parent=11 // pred_fallthru
          _
        // Predicated region
        $region17: #{tpu_custom_call.1} parent=11 // pred_check
          %p265 = pneg %p85
        $region18: #{tpu_custom_call.1} parent=11 // pred_check_branch
          %267 = sbr.rel (%p265) target = $region20
        $region19: #{tpu_custom_call.1} parent=11 // pred_region
          _
        $region20: #{tpu_custom_call.1} parent=11 // pred_fallthru
          _
        // Predicated region
        $region21: #{tpu_custom_call.1} parent=11 // pred_check
          %p268 = pneg %p106
        $region22: #{tpu_custom_call.1} parent=11 // pred_check_branch
          %270 = sbr.rel (%p268) target = $region24
        $region23: #{tpu_custom_call.1} parent=11 // pred_region
          %s272 = ssub.s32 24576, 24576
          %273 = vsyncadd [#allocation5], %s272
          %s274 = sshll.u32 [#allocation4], 4
          %s275 = int_to_ptr.vmem [resolvable:$true] %s274
          %280 = dma.hbm_to_vmem [thread:$0]  %s3, 24576, %s275, [#allocation5], 512, 512, 32
        $region24: #{tpu_custom_call.1} parent=11 // pred_fallthru
          _
        // Predicated region
        $region25: #{tpu_custom_call.1} parent=11 // pred_check
          %p281 = pneg %p127
        $region26: #{tpu_custom_call.1} parent=11 // pred_check_branch
          %283 = sbr.rel (%p281) target = $region28
        $region27: #{tpu_custom_call.1} parent=11 // pred_region
          _
        $region28: #{tpu_custom_call.1} parent=11 // pred_fallthru
          _
        // Predicated region
        $region29: #{tpu_custom_call.1} parent=11 // pred_check
          %p284 = pneg %p148
        $region30: #{tpu_custom_call.1} parent=11 // pred_check_branch
          %286 = sbr.rel (%p284) target = $region32
        $region31: #{tpu_custom_call.1} parent=11 // pred_region
          %s288 = ssub.s32 2048, 2048
          %289 = vsyncadd [#allocation5], %s288
          %s290 = sshll.u32 [#allocation6], 4
          %s291 = int_to_ptr.vmem [resolvable:$true] %s290
          %296 = dma.hbm_to_vmem [thread:$0]  %s5, 2048, %s291, [#allocation5], 64, 64, 4
        $region32: #{tpu_custom_call.1} parent=11 // pred_fallthru
          _
        // Predicated region
        $region33: #{tpu_custom_call.1} parent=11 // pred_check
          %p297 = pneg %p169
        $region34: #{tpu_custom_call.1} parent=11 // pred_check_branch
          %299 = sbr.rel (%p297) target = $region36
        $region35: #{tpu_custom_call.1} parent=11 // pred_region
          _
        $region36: #{tpu_custom_call.1} parent=11 // pred_fallthru
          _
        // Predicated region
        $region37: #{tpu_custom_call.1} parent=11 // pred_check
          %p300 = pneg %p190
        $region38: #{tpu_custom_call.1} parent=11 // pred_check_branch
          %302 = sbr.rel (%p300) target = $region40
        $region39: #{tpu_custom_call.1} parent=11 // pred_region
          _
        $region40: #{tpu_custom_call.1} parent=11 // pred_fallthru
          _
        // Predicated region
        $region41: #{tpu_custom_call.1} parent=11 // pred_check
          %p303 = pneg %p211
        $region42: #{tpu_custom_call.1} parent=11 // pred_check_branch
          %305 = sbr.rel (%p303) target = $region44
        $region43: #{tpu_custom_call.1} parent=11 // pred_region
          _
        $region44: #{tpu_custom_call.1} parent=11 // pred_fallthru
          _
      $region12: #{tpu_custom_call.1} parent=5 // pred_fallthru
        _
      %p306 = scmp.lt.s32.totalorder %s17, 2
      // Predicated region
      $region45: #{tpu_custom_call.1} parent=5 // pred_check
        %p307 = pneg %p306
      $region46: #{tpu_custom_call.1} parent=5 // pred_check_branch
        %309 = sbr.rel (%p307) target = $region48
      $region47: #{tpu_custom_call.1} parent=5 // pred_region
        // Predicated region
        $region49: #{tpu_custom_call.1} parent=47 // pred_check
          %p310 = pneg %p37
        $region50: #{tpu_custom_call.1} parent=47 // pred_check_branch
          %312 = sbr.rel (%p310) target = $region52
        $region51: #{tpu_custom_call.1} parent=47 // pred_region
          %s313 = smul.u32 2, %s17
          %p314 = scmp.lt.s32.totalorder %s313, 3
          %s315 = scalar_select %p314, %s313, 3
          %s316 = smul.addr %s315, 4
          %s317 = scalar_lea.vmem %s0, %s316
          %s318 = smul.u32 2, %s17
        $region52: #{tpu_custom_call.1} parent=47 // pred_fallthru
          _
      $region48: #{tpu_custom_call.1} parent=5 // pred_fallthru
        _
      %p319 = scmp.le.s32.totalorder 1, %s17
      %p320 = scmp.lt.s32.totalorder %s17, 3
      %p321 = pnand %p319, %p320
      %p322 = pneg %p321
      // Predicated region
      $region53: #{tpu_custom_call.1} parent=5 // pred_check
        _
      $region54: #{tpu_custom_call.1} parent=5 // pred_check_branch
        %324 = sbr.rel (%p321) target = $region56
      $region55: #{tpu_custom_call.1} parent=5 // pred_region
        %s325 = ssub.s32 %s17, 1
        // Predicated region
        $region57: #{tpu_custom_call.1} parent=55 // pred_check
          %p326 = pneg %p64
        $region58: #{tpu_custom_call.1} parent=55 // pred_check_branch
          %328 = sbr.rel (%p326) target = $region60
        $region59: #{tpu_custom_call.1} parent=55 // pred_region
          %329 = dma.done [#allocation3], 4608
        $region60: #{tpu_custom_call.1} parent=55 // pred_fallthru
          _
        // Predicated region
        $region61: #{tpu_custom_call.1} parent=55 // pred_check
          %p330 = pneg %p106
        $region62: #{tpu_custom_call.1} parent=55 // pred_check_branch
          %332 = sbr.rel (%p330) target = $region64
        $region63: #{tpu_custom_call.1} parent=55 // pred_region
          %333 = dma.done [#allocation5], 24576
        $region64: #{tpu_custom_call.1} parent=55 // pred_fallthru
          _
        // Predicated region
        $region65: #{tpu_custom_call.1} parent=55 // pred_check
          %p334 = pneg %p148
        $region66: #{tpu_custom_call.1} parent=55 // pred_check_branch
          %336 = sbr.rel (%p334) target = $region68
        $region67: #{tpu_custom_call.1} parent=55 // pred_region
          %337 = dma.done [#allocation5], 2048
        $region68: #{tpu_custom_call.1} parent=55 // pred_fallthru
          _
        %s338 = smul.u32 2, %s22
        %p339 = scmp.lt.s32.totalorder %s338, 3
        %s340 = scalar_select %p339, %s338, 3
        %s341 = smul.addr %s340, 4
        %s342 = scalar_lea.vmem %s0, %s341
        %p343 = pneg %p43
        %p344 = pneg %p40
        %p345 = pneg %p64
        %p346 = pneg %p61
        %p347 = pneg %p85
        %p348 = pneg %p82
        %p349 = pneg %p106
        %p350 = pneg %p103
        %p351 = pneg %p127
        %p352 = pneg %p124
        %p353 = pneg %p148
        %p354 = pneg %p145
        %p355 = pneg %p169
        %p356 = pneg %p166
        %p357 = pneg %p190
        %p358 = pneg %p187
        %p359 = pneg %p211
        %p360 = pneg %p208
        %p361 = pneg %p237
        %p362 = pneg %p234
        %s363 = smul.u32 2, %s22
        %p364 = scmp.lt.s32.totalorder %s363, 3
        %s365 = scalar_select %p364, %s363, 3
        %s366 = smul.addr %s365, 8
        %s367 = scalar_lea.vmem %s9, %s366
        %s368 = smul.u32 2, %s22
        %p369 = scmp.lt.s32.totalorder %s368, 3
        %s370 = scalar_select %p369, %s368, 3
        %s371 = smul.addr %s370, 4
        %s372 = scalar_lea.vmem %s0, %s371
        %s373 = smul.u32 2, %s22
        %s374 = smul.u32 2, %s22
        %p375 = scmp.lt.s32.totalorder %s374, 3
        %s376 = scalar_select %p375, %s374, 3
        %s377 = smul.addr %s376, 8
        %s378 = scalar_lea.vmem %s9, %s377
        %s379 = smul.u32 2, %s22
        %v381 = vld [vmem:[%s372] sm:$0xf]
        %v382 = vld [vmem:[%s372 + $0x4] sm:$0xf]
        %v383 = vld [vmem:[#allocation2] sm:$0xff]
        %v384 = vld [vmem:[#allocation2 + $0x8] sm:$0xff]
        %v385 = vld [vmem:[#allocation2 + $0x10] sm:$0xff]
        %v386 = vld [vmem:[#allocation2 + $0x18] sm:$0xff]
        %v387 = vld [vmem:[#allocation2 + $0x20] sm:$0xff]
        %v388 = vld [vmem:[#allocation2 + $0x28] sm:$0xff]
        %v389 = vld [vmem:[#allocation2 + $0x30] sm:$0xff]
        %v390 = vld [vmem:[#allocation2 + $0x38] sm:$0xff]
        %v391 = vld [vmem:[#allocation2 + $0x40] sm:$0xff]
        %v392 = vld [vmem:[#allocation2 + $0x48] sm:$0xff]
        %v393 = vld [vmem:[#allocation2 + $0x50] sm:$0xff]
        %v394 = vld [vmem:[#allocation2 + $0x58] sm:$0xff]
        %v395 = vld [vmem:[#allocation2 + $0x60] sm:$0xff]
        %v396 = vld [vmem:[#allocation2 + $0x68] sm:$0xff]
        %v397 = vld [vmem:[#allocation2 + $0x70] sm:$0xff]
        %v398 = vld [vmem:[#allocation2 + $0x78] sm:$0xff]
        %v399 = vld [vmem:[#allocation2 + $0x80] sm:$0xff]
        %v400 = vld [vmem:[#allocation2 + $0x88] sm:$0xff]
        %v401 = vld [vmem:[#allocation2 + $0x90] sm:$0xff]
        %v402 = vld [vmem:[#allocation2 + $0x98] sm:$0xff]
        %v403 = vld [vmem:[#allocation2 + $0xa0] sm:$0xff]
        %v404 = vld [vmem:[#allocation2 + $0xa8] sm:$0xff]
        %v405 = vld [vmem:[#allocation2 + $0xb0] sm:$0xff]
        %v406 = vld [vmem:[#allocation2 + $0xb8] sm:$0xff]
        %v407 = vld [vmem:[#allocation2 + $0xc0] sm:$0xff]
        %v408 = vld [vmem:[#allocation2 + $0xc8] sm:$0xff]
        %v409 = vld [vmem:[#allocation2 + $0xd0] sm:$0xff]
        %v410 = vld [vmem:[#allocation2 + $0xd8] sm:$0xff]
        %v411 = vld [vmem:[#allocation2 + $0xe0] sm:$0xff]
        %v412 = vld [vmem:[#allocation2 + $0xe8] sm:$0xff]
        %v413 = vld [vmem:[#allocation2 + $0xf0] sm:$0xff]
        %v414 = vld [vmem:[#allocation2 + $0xf8] sm:$0xff]
        %v415 = vld [vmem:[#allocation2 + $0x100] sm:$0xff]
        %v416 = vld [vmem:[#allocation2 + $0x108] sm:$0xff]
        %v417 = vld [vmem:[#allocation2 + $0x110] sm:$0xff]
        %v418 = vld [vmem:[#allocation2 + $0x118] sm:$0xff]
        %v421 = vunpack.c.l.b16 %v381
        %v422 = vunpack.c.l.b16 %v382
        %v423 = vpack.c.b16 %v422, %v421
        %v460 = vunpack.c.l.b16 %v383
        %v461 = vunpack.c.h.b16 %v383
        %v462 = vunpack.c.l.b16 %v384
        %v463 = vunpack.c.h.b16 %v384
        %v464 = vunpack.c.l.b16 %v385
        %v465 = vunpack.c.h.b16 %v385
        %v466 = vunpack.c.l.b16 %v386
        %v467 = vunpack.c.h.b16 %v386
        %v468 = vunpack.c.l.b16 %v387
        %v469 = vunpack.c.h.b16 %v387
        %v470 = vunpack.c.l.b16 %v388
        %v471 = vunpack.c.h.b16 %v388
        %v472 = vunpack.c.l.b16 %v389
        %v473 = vunpack.c.h.b16 %v389
        %v474 = vunpack.c.l.b16 %v390
        %v475 = vunpack.c.h.b16 %v390
        %v476 = vunpack.c.l.b16 %v391
        %v477 = vunpack.c.h.b16 %v391
        %v478 = vunpack.c.l.b16 %v392
        %v479 = vunpack.c.h.b16 %v392
        %v480 = vunpack.c.l.b16 %v393
        %v481 = vunpack.c.h.b16 %v393
        %v482 = vunpack.c.l.b16 %v394
        %v483 = vunpack.c.h.b16 %v394
        %v484 = vunpack.c.l.b16 %v395
        %v485 = vunpack.c.h.b16 %v395
        %v486 = vunpack.c.l.b16 %v396
        %v487 = vunpack.c.h.b16 %v396
        %v488 = vunpack.c.l.b16 %v397
        %v489 = vunpack.c.h.b16 %v397
        %v490 = vunpack.c.l.b16 %v398
        %v491 = vunpack.c.h.b16 %v398
        %v492 = vunpack.c.l.b16 %v399
        %v493 = vunpack.c.h.b16 %v399
        %v494 = vunpack.c.l.b16 %v400
        %v495 = vunpack.c.h.b16 %v400
        %v496 = vunpack.c.l.b16 %v401
        %v497 = vunpack.c.h.b16 %v401
        %v498 = vunpack.c.l.b16 %v402
        %v499 = vunpack.c.h.b16 %v402
        %v500 = vunpack.c.l.b16 %v403
        %v501 = vunpack.c.h.b16 %v403
        %v502 = vunpack.c.l.b16 %v404
        %v503 = vunpack.c.h.b16 %v404
        %v504 = vunpack.c.l.b16 %v405
        %v505 = vunpack.c.h.b16 %v405
        %v506 = vunpack.c.l.b16 %v406
        %v507 = vunpack.c.h.b16 %v406
        %v508 = vunpack.c.l.b16 %v407
        %v509 = vunpack.c.h.b16 %v407
        %v510 = vunpack.c.l.b16 %v408
        %v511 = vunpack.c.h.b16 %v408
        %v512 = vunpack.c.l.b16 %v409
        %v513 = vunpack.c.h.b16 %v409
        %v514 = vunpack.c.l.b16 %v410
        %v515 = vunpack.c.h.b16 %v410
        %v516 = vunpack.c.l.b16 %v411
        %v517 = vunpack.c.h.b16 %v411
        %v518 = vunpack.c.l.b16 %v412
        %v519 = vunpack.c.h.b16 %v412
        %v520 = vunpack.c.l.b16 %v413
        %v521 = vunpack.c.h.b16 %v413
        %v522 = vunpack.c.l.b16 %v414
        %v523 = vunpack.c.h.b16 %v414
        %v524 = vunpack.c.l.b16 %v415
        %v525 = vunpack.c.h.b16 %v415
        %v526 = vunpack.c.l.b16 %v416
        %v527 = vunpack.c.h.b16 %v416
        %v528 = vunpack.c.l.b16 %v417
        %v529 = vunpack.c.h.b16 %v417
        %v530 = vunpack.c.l.b16 %v418
        %v531 = vunpack.c.h.b16 %v418
        %v532 = vpack.c.b16 %v472, %v460
        %v533 = vpack.c.b16 %v473, %v461
        %v534 = vpack.c.b16 %v474, %v462
        %v535 = vpack.c.b16 %v475, %v463
        %v536 = vpack.c.b16 %v476, %v464
        %v537 = vpack.c.b16 %v477, %v465
        %v538 = vpack.c.b16 %v478, %v466
        %v539 = vpack.c.b16 %v479, %v467
        %v540 = vpack.c.b16 %v480, %v468
        %v541 = vpack.c.b16 %v481, %v469
        %v542 = vpack.c.b16 %v482, %v470
        %v543 = vpack.c.b16 %v483, %v471
        %v544 = vpack.c.b16 %v496, %v484
        %v545 = vpack.c.b16 %v497, %v485
        %v546 = vpack.c.b16 %v498, %v486
        %v547 = vpack.c.b16 %v499, %v487
        %v548 = vpack.c.b16 %v500, %v488
        %v549 = vpack.c.b16 %v501, %v489
        %v550 = vpack.c.b16 %v502, %v490
        %v551 = vpack.c.b16 %v503, %v491
        %v552 = vpack.c.b16 %v504, %v492
        %v553 = vpack.c.b16 %v505, %v493
        %v554 = vpack.c.b16 %v506, %v494
        %v555 = vpack.c.b16 %v507, %v495
        %v556 = vpack.c.b16 %v520, %v508
        %v557 = vpack.c.b16 %v521, %v509
        %v558 = vpack.c.b16 %v522, %v510
        %v559 = vpack.c.b16 %v523, %v511
        %v560 = vpack.c.b16 %v524, %v512
        %v561 = vpack.c.b16 %v525, %v513
        %v562 = vpack.c.b16 %v526, %v514
        %v563 = vpack.c.b16 %v527, %v515
        %v564 = vpack.c.b16 %v528, %v516
        %v565 = vpack.c.b16 %v529, %v517
        %v566 = vpack.c.b16 %v530, %v518
        %v567 = vpack.c.b16 %v531, %v519
        %vm604 = vcmask 392192
        %v606 = vsel %vm604, %v423, 0
        %608 = vmatprep.subr.bf16.mxu0 %v533
        %609 = vmatpush1.bf16.msra.mxu0 %v532
        %610 = vmatprep.subr.bf16.mxu0 %v545
        %611 = vmatpush1.bf16.msra.mxu0 %v544
        %612 = vmatprep.subr.bf16.mxu0 %v557
        %613 = vmatpush1.bf16.msra.mxu0 %v556
        %614 = vmatprep.subr.bf16.mxu0 0
        %615 = vmatpush1.bf16.msra.mxu0 0
        %616 = vmatprep.subr.bf16.mxu0 0
        %617 = vmatpush1.bf16.msra.mxu0 0
        %618 = vmatprep.subr.bf16.mxu0 0
        %619 = vmatpush1.bf16.msra.mxu0 0
        %620 = vmatprep.subr.bf16.mxu0 0
        %621 = vmatpush1.bf16.msra.mxu0 0
        %622 = vmatprep.subr.bf16.mxu0 0
        %623 = vmatpush1.bf16.msra.mxu0 0
        %624 = vmatprep.subr.bf16.mxu0 0
        %625 = vmatpush1.bf16.msra.mxu0 0
        %626 = vmatprep.subr.bf16.mxu0 0
        %627 = vmatpush1.bf16.msra.mxu0 0
        %628 = vmatprep.subr.bf16.mxu0 0
        %629 = vmatpush1.bf16.msra.mxu0 0
        %630 = vmatprep.subr.bf16.mxu0 0
        %631 = vmatpush1.bf16.msra.mxu0 0
        %632 = vmatprep.subr.bf16.mxu0 0
        %633 = vmatpush1.bf16.msra.mxu0 0
        %634 = vmatprep.subr.bf16.mxu0 0
        %635 = vmatpush1.bf16.msra.mxu0 0
        %636 = vmatprep.subr.bf16.mxu0 0
        %637 = vmatpush1.bf16.msra.mxu0 0
        %638 = vmatprep.subr.bf16.mxu0 0
        %639 = vmatpush1.bf16.msra.mxu0 0
        %640 = vmatprep.mubr.bf16.mxu0 0
        %641 = vmatmul.mubr.bf16.gmra.mrb[0].mxu0 %v606
        %v642 = vpop.f32.mrb[0].mxu0
        %v643 = vadd.f32 0.0, %v642
        %v644 = vpop.f32.mrb[0].mxu0
        %v645 = vadd.f32 0.0, %v644
        %v646 = vpop.f32.mrb[0].mxu0
        %v647 = vadd.f32 0.0, %v646
        %v648 = vpop.f32.mrb[0].mxu0
        %v649 = vadd.f32 0.0, %v648
        %650 = vdwg.mxu0
        %651 = vmatprep.subr.bf16.mxu0 %v535
        %652 = vmatpush1.bf16.msra.mxu0 %v534
        %653 = vmatprep.subr.bf16.mxu0 %v547
        %654 = vmatpush1.bf16.msra.mxu0 %v546
        %655 = vmatprep.subr.bf16.mxu0 %v559
        %656 = vmatpush1.bf16.msra.mxu0 %v558
        %657 = vmatprep.subr.bf16.mxu0 0
        %658 = vmatpush1.bf16.msra.mxu0 0
        %659 = vmatprep.subr.bf16.mxu0 0
        %660 = vmatpush1.bf16.msra.mxu0 0
        %661 = vmatprep.subr.bf16.mxu0 0
        %662 = vmatpush1.bf16.msra.mxu0 0
        %663 = vmatprep.subr.bf16.mxu0 0
        %664 = vmatpush1.bf16.msra.mxu0 0
        %665 = vmatprep.subr.bf16.mxu0 0
        %666 = vmatpush1.bf16.msra.mxu0 0
        %667 = vmatprep.subr.bf16.mxu0 0
        %668 = vmatpush1.bf16.msra.mxu0 0
        %669 = vmatprep.subr.bf16.mxu0 0
        %670 = vmatpush1.bf16.msra.mxu0 0
        %671 = vmatprep.subr.bf16.mxu0 0
        %672 = vmatpush1.bf16.msra.mxu0 0
        %673 = vmatprep.subr.bf16.mxu0 0
        %674 = vmatpush1.bf16.msra.mxu0 0
        %675 = vmatprep.subr.bf16.mxu0 0
        %676 = vmatpush1.bf16.msra.mxu0 0
        %677 = vmatprep.subr.bf16.mxu0 0
        %678 = vmatpush1.bf16.msra.mxu0 0
        %679 = vmatprep.subr.bf16.mxu0 0
        %680 = vmatpush1.bf16.msra.mxu0 0
        %681 = vmatprep.subr.bf16.mxu0 0
        %682 = vmatpush1.bf16.msra.mxu0 0
        %683 = vmatprep.mubr.bf16.mxu0 0
        %684 = vmatmul.mubr.bf16.gmra.mrb[0].mxu0 %v606
        %v685 = vpop.f32.mrb[0].mxu0
        %v686 = vadd.f32 0.0, %v685
        %v687 = vpop.f32.mrb[0].mxu0
        %v688 = vadd.f32 0.0, %v687
        %v689 = vpop.f32.mrb[0].mxu0
        %v690 = vadd.f32 0.0, %v689
        %v691 = vpop.f32.mrb[0].mxu0
        %v692 = vadd.f32 0.0, %v691
        %693 = vdwg.mxu0
        %694 = vmatprep.subr.bf16.mxu0 %v537
        %695 = vmatpush1.bf16.msra.mxu0 %v536
        %696 = vmatprep.subr.bf16.mxu0 %v549
        %697 = vmatpush1.bf16.msra.mxu0 %v548
        %698 = vmatprep.subr.bf16.mxu0 %v561
        %699 = vmatpush1.bf16.msra.mxu0 %v560
        %700 = vmatprep.subr.bf16.mxu0 0
        %701 = vmatpush1.bf16.msra.mxu0 0
        %702 = vmatprep.subr.bf16.mxu0 0
        %703 = vmatpush1.bf16.msra.mxu0 0
        %704 = vmatprep.subr.bf16.mxu0 0
        %705 = vmatpush1.bf16.msra.mxu0 0
        %706 = vmatprep.subr.bf16.mxu0 0
        %707 = vmatpush1.bf16.msra.mxu0 0
        %708 = vmatprep.subr.bf16.mxu0 0
        %709 = vmatpush1.bf16.msra.mxu0 0
        %710 = vmatprep.subr.bf16.mxu0 0
        %711 = vmatpush1.bf16.msra.mxu0 0
        %712 = vmatprep.subr.bf16.mxu0 0
        %713 = vmatpush1.bf16.msra.mxu0 0
        %714 = vmatprep.subr.bf16.mxu0 0
        %715 = vmatpush1.bf16.msra.mxu0 0
        %716 = vmatprep.subr.bf16.mxu0 0
        %717 = vmatpush1.bf16.msra.mxu0 0
        %718 = vmatprep.subr.bf16.mxu0 0
        %719 = vmatpush1.bf16.msra.mxu0 0
        %720 = vmatprep.subr.bf16.mxu0 0
        %721 = vmatpush1.bf16.msra.mxu0 0
        %722 = vmatprep.subr.bf16.mxu0 0
        %723 = vmatpush1.bf16.msra.mxu0 0
        %724 = vmatprep.subr.bf16.mxu0 0
        %725 = vmatpush1.bf16.msra.mxu0 0
        %726 = vmatprep.mubr.bf16.mxu0 0
        %727 = vmatmul.mubr.bf16.gmra.mrb[0].mxu0 %v606
        %v728 = vpop.f32.mrb[0].mxu0
        %v729 = vadd.f32 0.0, %v728
        %v730 = vpop.f32.mrb[0].mxu0
        %v731 = vadd.f32 0.0, %v730
        %v732 = vpop.f32.mrb[0].mxu0
        %v733 = vadd.f32 0.0, %v732
        %v734 = vpop.f32.mrb[0].mxu0
        %v735 = vadd.f32 0.0, %v734
        %736 = vdwg.mxu0
        %737 = vmatprep.subr.bf16.mxu0 %v539
        %738 = vmatpush1.bf16.msra.mxu0 %v538
        %739 = vmatprep.subr.bf16.mxu0 %v551
        %740 = vmatpush1.bf16.msra.mxu0 %v550
        %741 = vmatprep.subr.bf16.mxu0 %v563
        %742 = vmatpush1.bf16.msra.mxu0 %v562
        %743 = vmatprep.subr.bf16.mxu0 0
        %744 = vmatpush1.bf16.msra.mxu0 0
        %745 = vmatprep.subr.bf16.mxu0 0
        %746 = vmatpush1.bf16.msra.mxu0 0
        %747 = vmatprep.subr.bf16.mxu0 0
        %748 = vmatpush1.bf16.msra.mxu0 0
        %749 = vmatprep.subr.bf16.mxu0 0
        %750 = vmatpush1.bf16.msra.mxu0 0
        %751 = vmatprep.subr.bf16.mxu0 0
        %752 = vmatpush1.bf16.msra.mxu0 0
        %753 = vmatprep.subr.bf16.mxu0 0
        %754 = vmatpush1.bf16.msra.mxu0 0
        %755 = vmatprep.subr.bf16.mxu0 0
        %756 = vmatpush1.bf16.msra.mxu0 0
        %757 = vmatprep.subr.bf16.mxu0 0
        %758 = vmatpush1.bf16.msra.mxu0 0
        %759 = vmatprep.subr.bf16.mxu0 0
        %760 = vmatpush1.bf16.msra.mxu0 0
        %761 = vmatprep.subr.bf16.mxu0 0
        %762 = vmatpush1.bf16.msra.mxu0 0
        %763 = vmatprep.subr.bf16.mxu0 0
        %764 = vmatpush1.bf16.msra.mxu0 0
        %765 = vmatprep.subr.bf16.mxu0 0
        %766 = vmatpush1.bf16.msra.mxu0 0
        %767 = vmatprep.subr.bf16.mxu0 0
        %768 = vmatpush1.bf16.msra.mxu0 0
        %769 = vmatprep.mubr.bf16.mxu0 0
        %770 = vmatmul.mubr.bf16.gmra.mrb[0].mxu0 %v606
        %v771 = vpop.f32.mrb[0].mxu0
        %v772 = vadd.f32 0.0, %v771
        %v773 = vpop.f32.mrb[0].mxu0
        %v774 = vadd.f32 0.0, %v773
        %v775 = vpop.f32.mrb[0].mxu0
        %v776 = vadd.f32 0.0, %v775
        %v777 = vpop.f32.mrb[0].mxu0
        %v778 = vadd.f32 0.0, %v777
        %779 = vdwg.mxu0
        %780 = vmatprep.subr.bf16.mxu0 %v541
        %781 = vmatpush1.bf16.msra.mxu0 %v540
        %782 = vmatprep.subr.bf16.mxu0 %v553
        %783 = vmatpush1.bf16.msra.mxu0 %v552
        %784 = vmatprep.subr.bf16.mxu0 %v565
        %785 = vmatpush1.bf16.msra.mxu0 %v564
        %786 = vmatprep.subr.bf16.mxu0 0
        %787 = vmatpush1.bf16.msra.mxu0 0
        %788 = vmatprep.subr.bf16.mxu0 0
        %789 = vmatpush1.bf16.msra.mxu0 0
        %790 = vmatprep.subr.bf16.mxu0 0
        %791 = vmatpush1.bf16.msra.mxu0 0
        %792 = vmatprep.subr.bf16.mxu0 0
        %793 = vmatpush1.bf16.msra.mxu0 0
        %794 = vmatprep.subr.bf16.mxu0 0
        %795 = vmatpush1.bf16.msra.mxu0 0
        %796 = vmatprep.subr.bf16.mxu0 0
        %797 = vmatpush1.bf16.msra.mxu0 0
        %798 = vmatprep.subr.bf16.mxu0 0
        %799 = vmatpush1.bf16.msra.mxu0 0
        %800 = vmatprep.subr.bf16.mxu0 0
        %801 = vmatpush1.bf16.msra.mxu0 0
        %802 = vmatprep.subr.bf16.mxu0 0
        %803 = vmatpush1.bf16.msra.mxu0 0
        %804 = vmatprep.subr.bf16.mxu0 0
        %805 = vmatpush1.bf16.msra.mxu0 0
        %806 = vmatprep.subr.bf16.mxu0 0
        %807 = vmatpush1.bf16.msra.mxu0 0
        %808 = vmatprep.subr.bf16.mxu0 0
        %809 = vmatpush1.bf16.msra.mxu0 0
        %810 = vmatprep.subr.bf16.mxu0 0
        %811 = vmatpush1.bf16.msra.mxu0 0
        %812 = vmatprep.mubr.bf16.mxu0 0
        %813 = vmatmul.mubr.bf16.gmra.mrb[0].mxu0 %v606
        %v814 = vpop.f32.mrb[0].mxu0
        %v815 = vadd.f32 0.0, %v814
        %v816 = vpop.f32.mrb[0].mxu0
        %v817 = vadd.f32 0.0, %v816
        %v818 = vpop.f32.mrb[0].mxu0
        %v819 = vadd.f32 0.0, %v818
        %v820 = vpop.f32.mrb[0].mxu0
        %v821 = vadd.f32 0.0, %v820
        %822 = vdwg.mxu0
        %823 = vmatprep.subr.bf16.mxu0 %v543
        %824 = vmatpush1.bf16.msra.mxu0 %v542
        %825 = vmatprep.subr.bf16.mxu0 %v555
        %826 = vmatpush1.bf16.msra.mxu0 %v554
        %827 = vmatprep.subr.bf16.mxu0 %v567
        %828 = vmatpush1.bf16.msra.mxu0 %v566
        %829 = vmatprep.subr.bf16.mxu0 0
        %830 = vmatpush1.bf16.msra.mxu0 0
        %831 = vmatprep.subr.bf16.mxu0 0
        %832 = vmatpush1.bf16.msra.mxu0 0
        %833 = vmatprep.subr.bf16.mxu0 0
        %834 = vmatpush1.bf16.msra.mxu0 0
        %835 = vmatprep.subr.bf16.mxu0 0
        %836 = vmatpush1.bf16.msra.mxu0 0
        %837 = vmatprep.subr.bf16.mxu0 0
        %838 = vmatpush1.bf16.msra.mxu0 0
        %839 = vmatprep.subr.bf16.mxu0 0
        %840 = vmatpush1.bf16.msra.mxu0 0
        %841 = vmatprep.subr.bf16.mxu0 0
        %842 = vmatpush1.bf16.msra.mxu0 0
        %843 = vmatprep.subr.bf16.mxu0 0
        %844 = vmatpush1.bf16.msra.mxu0 0
        %845 = vmatprep.subr.bf16.mxu0 0
        %846 = vmatpush1.bf16.msra.mxu0 0
        %847 = vmatprep.subr.bf16.mxu0 0
        %848 = vmatpush1.bf16.msra.mxu0 0
        %849 = vmatprep.subr.bf16.mxu0 0
        %850 = vmatpush1.bf16.msra.mxu0 0
        %851 = vmatprep.subr.bf16.mxu0 0
        %852 = vmatpush1.bf16.msra.mxu0 0
        %853 = vmatprep.subr.bf16.mxu0 0
        %854 = vmatpush1.bf16.msra.mxu0 0
        %855 = vmatprep.mubr.bf16.mxu0 0
        %856 = vmatmul.mubr.bf16.gmra.mrb[0].mxu0 %v606
        %v857 = vpop.f32.mrb[0].mxu0
        %v858 = vadd.f32 0.0, %v857
        %v859 = vpop.f32.mrb[0].mxu0
        %v860 = vadd.f32 0.0, %v859
        %v861 = vpop.f32.mrb[0].mxu0
        %v862 = vadd.f32 0.0, %v861
        %v863 = vpop.f32.mrb[0].mxu0
        %v864 = vadd.f32 0.0, %v863
        %865 = vdwg.mxu0
        %v866 = vmax.f32 %v643, %v688
        %v867 = vmax.f32 %v645, %v729
        %v868 = vmax.f32 %v686, %v731
        %v869 = vmax.f32 %v647, %v692
        %v870 = vmax.f32 %v649, %v733
        %v871 = vmax.f32 %v690, %v735
        %v872 = vmax.f32 %v772, %v817
        %v873 = vmax.f32 %v774, %v858
        %v874 = vmax.f32 %v815, %v860
        %v875 = vmax.f32 %v776, %v821
        %v876 = vmax.f32 %v778, %v862
        %v877 = vmax.f32 %v819, %v864
        %v878 = vmax.f32 %v866, %v872
        %v879 = vmax.f32 %v867, %v873
        %v880 = vmax.f32 %v868, %v874
        %v881 = vmax.f32 %v869, %v875
        %v882 = vmax.f32 %v870, %v876
        %v883 = vmax.f32 %v871, %v877
        %v884 = vld [vmem:[%s2] sm:$0x7]
        %v886 = vlaneseq
        %v887 = vshrl.u32 %v886, 7
        %v888 = vsub.s32 0, %v887
        %v889 = vrot.slane %v884, %v888
        %v890 = vlaneseq
        %v891 = vshrl.u32 %v890, 7
        %v892 = vsub.s32 1, %v891
        %v893 = vrot.slane %v884, %v892
        %v894 = vlaneseq
        %v895 = vshrl.u32 %v894, 7
        %v896 = vsub.s32 2, %v895
        %v897 = vrot.slane %v884, %v896
        %v901 = vadd.f32 %v878, %v889
        %v902 = vadd.f32 %v879, %v893
        %v903 = vadd.f32 %v880, %v897
        %v904 = vadd.f32 %v881, %v889
        %v905 = vadd.f32 %v882, %v893
        %v906 = vadd.f32 %v883, %v897
        %v907 = vmul.f32 %v901, 0.01
        %v908 = vmul.f32 %v902, 0.01
        %v909 = vmul.f32 %v903, 0.01
        %v910 = vmul.f32 %v904, 0.01
        %v911 = vmul.f32 %v905, 0.01
        %v912 = vmul.f32 %v906, 0.01
        %v913 = vmax.f32 %v901, %v907
        %v914 = vmax.f32 %v902, %v908
        %v915 = vmax.f32 %v903, %v909
        %v916 = vmax.f32 %v904, %v910
        %v917 = vmax.f32 %v905, %v911
        %v918 = vmax.f32 %v906, %v912
        %v919 = vpack.c.bf16 %v916, %v913
        %v920 = vpack.c.bf16 %v917, %v914
        %v921 = vpack.c.bf16 %v918, %v915
        %v922 = vld [vmem:[#allocation4] sm:$0xff]
        %v923 = vld [vmem:[#allocation4 + $0x8] sm:$0xff]
        %v924 = vld [vmem:[#allocation4 + $0x10] sm:$0xff]
        %v925 = vld [vmem:[#allocation4 + $0x18] sm:$0xff]
        %v926 = vld [vmem:[#allocation4 + $0x20] sm:$0xff]
        %v927 = vld [vmem:[#allocation4 + $0x28] sm:$0xff]
        %v928 = vld [vmem:[#allocation4 + $0x30] sm:$0xff]
        %v929 = vld [vmem:[#allocation4 + $0x38] sm:$0xff]
        %v930 = vld [vmem:[#allocation4 + $0x40] sm:$0xff]
        %v931 = vld [vmem:[#allocation4 + $0x48] sm:$0xff]
        %v932 = vld [vmem:[#allocation4 + $0x50] sm:$0xff]
        %v933 = vld [vmem:[#allocation4 + $0x58] sm:$0xff]
        %v934 = vld [vmem:[#allocation4 + $0x60] sm:$0xff]
        %v935 = vld [vmem:[#allocation4 + $0x68] sm:$0xff]
        %v936 = vld [vmem:[#allocation4 + $0x70] sm:$0xff]
        %v937 = vld [vmem:[#allocation4 + $0x78] sm:$0xff]
        %v938 = vld [vmem:[#allocation4 + $0x80] sm:$0xff]
        %v939 = vld [vmem:[#allocation4 + $0x88] sm:$0xff]
        %v940 = vld [vmem:[#allocation4 + $0x90] sm:$0xff]
        %v941 = vld [vmem:[#allocation4 + $0x98] sm:$0xff]
        %v942 = vld [vmem:[#allocation4 + $0xa0] sm:$0xff]
        %v943 = vld [vmem:[#allocation4 + $0xa8] sm:$0xff]
        %v944 = vld [vmem:[#allocation4 + $0xb0] sm:$0xff]
        %v945 = vld [vmem:[#allocation4 + $0xb8] sm:$0xff]
        %v946 = vld [vmem:[#allocation4 + $0xc0] sm:$0xff]
        %v947 = vld [vmem:[#allocation4 + $0xc8] sm:$0xff]
        %v948 = vld [vmem:[#allocation4 + $0xd0] sm:$0xff]
        %v949 = vld [vmem:[#allocation4 + $0xd8] sm:$0xff]
        %v950 = vld [vmem:[#allocation4 + $0xe0] sm:$0xff]
        %v951 = vld [vmem:[#allocation4 + $0xe8] sm:$0xff]
        %v952 = vld [vmem:[#allocation4 + $0xf0] sm:$0xff]
        %v953 = vld [vmem:[#allocation4 + $0xf8] sm:$0xff]
        %v954 = vld [vmem:[#allocation4 + $0x100] sm:$0xff]
        %v955 = vld [vmem:[#allocation4 + $0x108] sm:$0xff]
        %v956 = vld [vmem:[#allocation4 + $0x110] sm:$0xff]
        %v957 = vld [vmem:[#allocation4 + $0x118] sm:$0xff]
        %v958 = vld [vmem:[#allocation4 + $0x120] sm:$0xff]
        %v959 = vld [vmem:[#allocation4 + $0x128] sm:$0xff]
        %v960 = vld [vmem:[#allocation4 + $0x130] sm:$0xff]
        %v961 = vld [vmem:[#allocation4 + $0x138] sm:$0xff]
        %v962 = vld [vmem:[#allocation4 + $0x140] sm:$0xff]
        %v963 = vld [vmem:[#allocation4 + $0x148] sm:$0xff]
        %v964 = vld [vmem:[#allocation4 + $0x150] sm:$0xff]
        %v965 = vld [vmem:[#allocation4 + $0x158] sm:$0xff]
        %v966 = vld [vmem:[#allocation4 + $0x160] sm:$0xff]
        %v967 = vld [vmem:[#allocation4 + $0x168] sm:$0xff]
        %v968 = vld [vmem:[#allocation4 + $0x170] sm:$0xff]
        %v969 = vld [vmem:[#allocation4 + $0x178] sm:$0xff]
        %v970 = vld [vmem:[#allocation4 + $0x180] sm:$0xff]
        %v971 = vld [vmem:[#allocation4 + $0x188] sm:$0xff]
        %v972 = vld [vmem:[#allocation4 + $0x190] sm:$0xff]
        %v973 = vld [vmem:[#allocation4 + $0x198] sm:$0xff]
        %v974 = vld [vmem:[#allocation4 + $0x1a0] sm:$0xff]
        %v975 = vld [vmem:[#allocation4 + $0x1a8] sm:$0xff]
        %v976 = vld [vmem:[#allocation4 + $0x1b0] sm:$0xff]
        %v977 = vld [vmem:[#allocation4 + $0x1b8] sm:$0xff]
        %v978 = vld [vmem:[#allocation4 + $0x1c0] sm:$0xff]
        %v979 = vld [vmem:[#allocation4 + $0x1c8] sm:$0xff]
        %v980 = vld [vmem:[#allocation4 + $0x1d0] sm:$0xff]
        %v981 = vld [vmem:[#allocation4 + $0x1d8] sm:$0xff]
        %v982 = vld [vmem:[#allocation4 + $0x1e0] sm:$0xff]
        %v983 = vld [vmem:[#allocation4 + $0x1e8] sm:$0xff]
        %v984 = vld [vmem:[#allocation4 + $0x1f0] sm:$0xff]
        %v985 = vld [vmem:[#allocation4 + $0x1f8] sm:$0xff]
        %v986 = vld [vmem:[#allocation4 + $0x200] sm:$0xff]
        %v987 = vld [vmem:[#allocation4 + $0x208] sm:$0xff]
        %v988 = vld [vmem:[#allocation4 + $0x210] sm:$0xff]
        %v989 = vld [vmem:[#allocation4 + $0x218] sm:$0xff]
        %v990 = vld [vmem:[#allocation4 + $0x220] sm:$0xff]
        %v991 = vld [vmem:[#allocation4 + $0x228] sm:$0xff]
        %v992 = vld [vmem:[#allocation4 + $0x230] sm:$0xff]
        %v993 = vld [vmem:[#allocation4 + $0x238] sm:$0xff]
        %v994 = vld [vmem:[#allocation4 + $0x240] sm:$0xff]
        %v995 = vld [vmem:[#allocation4 + $0x248] sm:$0xff]
        %v996 = vld [vmem:[#allocation4 + $0x250] sm:$0xff]
        %v997 = vld [vmem:[#allocation4 + $0x258] sm:$0xff]
        %v998 = vld [vmem:[#allocation4 + $0x260] sm:$0xff]
        %v999 = vld [vmem:[#allocation4 + $0x268] sm:$0xff]
        %v1000 = vld [vmem:[#allocation4 + $0x270] sm:$0xff]
        %v1001 = vld [vmem:[#allocation4 + $0x278] sm:$0xff]
        %v1002 = vld [vmem:[#allocation4 + $0x280] sm:$0xff]
        %v1003 = vld [vmem:[#allocation4 + $0x288] sm:$0xff]
        %v1004 = vld [vmem:[#allocation4 + $0x290] sm:$0xff]
        %v1005 = vld [vmem:[#allocation4 + $0x298] sm:$0xff]
        %v1006 = vld [vmem:[#allocation4 + $0x2a0] sm:$0xff]
        %v1007 = vld [vmem:[#allocation4 + $0x2a8] sm:$0xff]
        %v1008 = vld [vmem:[#allocation4 + $0x2b0] sm:$0xff]
        %v1009 = vld [vmem:[#allocation4 + $0x2b8] sm:$0xff]
        %v1010 = vld [vmem:[#allocation4 + $0x2c0] sm:$0xff]
        %v1011 = vld [vmem:[#allocation4 + $0x2c8] sm:$0xff]
        %v1012 = vld [vmem:[#allocation4 + $0x2d0] sm:$0xff]
        %v1013 = vld [vmem:[#allocation4 + $0x2d8] sm:$0xff]
        %v1014 = vld [vmem:[#allocation4 + $0x2e0] sm:$0xff]
        %v1015 = vld [vmem:[#allocation4 + $0x2e8] sm:$0xff]
        %v1016 = vld [vmem:[#allocation4 + $0x2f0] sm:$0xff]
        %v1017 = vld [vmem:[#allocation4 + $0x2f8] sm:$0xff]
        %v1018 = vld [vmem:[#allocation4 + $0x300] sm:$0xff]
        %v1019 = vld [vmem:[#allocation4 + $0x308] sm:$0xff]
        %v1020 = vld [vmem:[#allocation4 + $0x310] sm:$0xff]
        %v1021 = vld [vmem:[#allocation4 + $0x318] sm:$0xff]
        %v1022 = vld [vmem:[#allocation4 + $0x320] sm:$0xff]
        %v1023 = vld [vmem:[#allocation4 + $0x328] sm:$0xff]
        %v1024 = vld [vmem:[#allocation4 + $0x330] sm:$0xff]
        %v1025 = vld [vmem:[#allocation4 + $0x338] sm:$0xff]
        %v1026 = vld [vmem:[#allocation4 + $0x340] sm:$0xff]
        %v1027 = vld [vmem:[#allocation4 + $0x348] sm:$0xff]
        %v1028 = vld [vmem:[#allocation4 + $0x350] sm:$0xff]
        %v1029 = vld [vmem:[#allocation4 + $0x358] sm:$0xff]
        %v1030 = vld [vmem:[#allocation4 + $0x360] sm:$0xff]
        %v1031 = vld [vmem:[#allocation4 + $0x368] sm:$0xff]
        %v1032 = vld [vmem:[#allocation4 + $0x370] sm:$0xff]
        %v1033 = vld [vmem:[#allocation4 + $0x378] sm:$0xff]
        %v1034 = vld [vmem:[#allocation4 + $0x380] sm:$0xff]
        %v1035 = vld [vmem:[#allocation4 + $0x388] sm:$0xff]
        %v1036 = vld [vmem:[#allocation4 + $0x390] sm:$0xff]
        %v1037 = vld [vmem:[#allocation4 + $0x398] sm:$0xff]
        %v1038 = vld [vmem:[#allocation4 + $0x3a0] sm:$0xff]
        %v1039 = vld [vmem:[#allocation4 + $0x3a8] sm:$0xff]
        %v1040 = vld [vmem:[#allocation4 + $0x3b0] sm:$0xff]
        %v1041 = vld [vmem:[#allocation4 + $0x3b8] sm:$0xff]
        %v1042 = vld [vmem:[#allocation4 + $0x3c0] sm:$0xff]
        %v1043 = vld [vmem:[#allocation4 + $0x3c8] sm:$0xff]
        %v1044 = vld [vmem:[#allocation4 + $0x3d0] sm:$0xff]
        %v1045 = vld [vmem:[#allocation4 + $0x3d8] sm:$0xff]
        %v1046 = vld [vmem:[#allocation4 + $0x3e0] sm:$0xff]
        %v1047 = vld [vmem:[#allocation4 + $0x3e8] sm:$0xff]
        %v1048 = vld [vmem:[#allocation4 + $0x3f0] sm:$0xff]
        %v1049 = vld [vmem:[#allocation4 + $0x3f8] sm:$0xff]
        %v1050 = vld [vmem:[#allocation4 + $0x400] sm:$0xff]
        %v1051 = vld [vmem:[#allocation4 + $0x408] sm:$0xff]
        %v1052 = vld [vmem:[#allocation4 + $0x410] sm:$0xff]
        %v1053 = vld [vmem:[#allocation4 + $0x418] sm:$0xff]
        %v1054 = vld [vmem:[#allocation4 + $0x420] sm:$0xff]
        %v1055 = vld [vmem:[#allocation4 + $0x428] sm:$0xff]
        %v1056 = vld [vmem:[#allocation4 + $0x430] sm:$0xff]
        %v1057 = vld [vmem:[#allocation4 + $0x438] sm:$0xff]
        %v1058 = vld [vmem:[#allocation4 + $0x440] sm:$0xff]
        %v1059 = vld [vmem:[#allocation4 + $0x448] sm:$0xff]
        %v1060 = vld [vmem:[#allocation4 + $0x450] sm:$0xff]
        %v1061 = vld [vmem:[#allocation4 + $0x458] sm:$0xff]
        %v1062 = vld [vmem:[#allocation4 + $0x460] sm:$0xff]
        %v1063 = vld [vmem:[#allocation4 + $0x468] sm:$0xff]
        %v1064 = vld [vmem:[#allocation4 + $0x470] sm:$0xff]
        %v1065 = vld [vmem:[#allocation4 + $0x478] sm:$0xff]
        %v1066 = vld [vmem:[#allocation4 + $0x480] sm:$0xff]
        %v1067 = vld [vmem:[#allocation4 + $0x488] sm:$0xff]
        %v1068 = vld [vmem:[#allocation4 + $0x490] sm:$0xff]
        %v1069 = vld [vmem:[#allocation4 + $0x498] sm:$0xff]
        %v1070 = vld [vmem:[#allocation4 + $0x4a0] sm:$0xff]
        %v1071 = vld [vmem:[#allocation4 + $0x4a8] sm:$0xff]
        %v1072 = vld [vmem:[#allocation4 + $0x4b0] sm:$0xff]
        %v1073 = vld [vmem:[#allocation4 + $0x4b8] sm:$0xff]
        %v1074 = vld [vmem:[#allocation4 + $0x4c0] sm:$0xff]
        %v1075 = vld [vmem:[#allocation4 + $0x4c8] sm:$0xff]
        %v1076 = vld [vmem:[#allocation4 + $0x4d0] sm:$0xff]
        %v1077 = vld [vmem:[#allocation4 + $0x4d8] sm:$0xff]
        %v1078 = vld [vmem:[#allocation4 + $0x4e0] sm:$0xff]
        %v1079 = vld [vmem:[#allocation4 + $0x4e8] sm:$0xff]
        %v1080 = vld [vmem:[#allocation4 + $0x4f0] sm:$0xff]
        %v1081 = vld [vmem:[#allocation4 + $0x4f8] sm:$0xff]
        %v1082 = vld [vmem:[#allocation4 + $0x500] sm:$0xff]
        %v1083 = vld [vmem:[#allocation4 + $0x508] sm:$0xff]
        %v1084 = vld [vmem:[#allocation4 + $0x510] sm:$0xff]
        %v1085 = vld [vmem:[#allocation4 + $0x518] sm:$0xff]
        %v1086 = vld [vmem:[#allocation4 + $0x520] sm:$0xff]
        %v1087 = vld [vmem:[#allocation4 + $0x528] sm:$0xff]
        %v1088 = vld [vmem:[#allocation4 + $0x530] sm:$0xff]
        %v1089 = vld [vmem:[#allocation4 + $0x538] sm:$0xff]
        %v1090 = vld [vmem:[#allocation4 + $0x540] sm:$0xff]
        %v1091 = vld [vmem:[#allocation4 + $0x548] sm:$0xff]
        %v1092 = vld [vmem:[#allocation4 + $0x550] sm:$0xff]
        %v1093 = vld [vmem:[#allocation4 + $0x558] sm:$0xff]
        %v1094 = vld [vmem:[#allocation4 + $0x560] sm:$0xff]
        %v1095 = vld [vmem:[#allocation4 + $0x568] sm:$0xff]
        %v1096 = vld [vmem:[#allocation4 + $0x570] sm:$0xff]
        %v1097 = vld [vmem:[#allocation4 + $0x578] sm:$0xff]
        %v1098 = vld [vmem:[#allocation4 + $0x580] sm:$0xff]
        %v1099 = vld [vmem:[#allocation4 + $0x588] sm:$0xff]
        %v1100 = vld [vmem:[#allocation4 + $0x590] sm:$0xff]
        %v1101 = vld [vmem:[#allocation4 + $0x598] sm:$0xff]
        %v1102 = vld [vmem:[#allocation4 + $0x5a0] sm:$0xff]
        %v1103 = vld [vmem:[#allocation4 + $0x5a8] sm:$0xff]
        %v1104 = vld [vmem:[#allocation4 + $0x5b0] sm:$0xff]
        %v1105 = vld [vmem:[#allocation4 + $0x5b8] sm:$0xff]
        %v1106 = vld [vmem:[#allocation4 + $0x5c0] sm:$0xff]
        %v1107 = vld [vmem:[#allocation4 + $0x5c8] sm:$0xff]
        %v1108 = vld [vmem:[#allocation4 + $0x5d0] sm:$0xff]
        %v1109 = vld [vmem:[#allocation4 + $0x5d8] sm:$0xff]
        %v1110 = vld [vmem:[#allocation4 + $0x5e0] sm:$0xff]
        %v1111 = vld [vmem:[#allocation4 + $0x5e8] sm:$0xff]
        %v1112 = vld [vmem:[#allocation4 + $0x5f0] sm:$0xff]
        %v1113 = vld [vmem:[#allocation4 + $0x5f8] sm:$0xff]
        %v1306 = vunpack.c.l.b16 %v922
        %v1307 = vunpack.c.h.b16 %v922
        %v1308 = vunpack.c.l.b16 %v923
        %v1309 = vunpack.c.h.b16 %v923
        %v1310 = vunpack.c.l.b16 %v924
        %v1311 = vunpack.c.h.b16 %v924
        %v1312 = vunpack.c.l.b16 %v925
        %v1313 = vunpack.c.h.b16 %v925
        %v1314 = vunpack.c.l.b16 %v926
        %v1315 = vunpack.c.h.b16 %v926
        %v1316 = vunpack.c.l.b16 %v927
        %v1317 = vunpack.c.h.b16 %v927
        %v1318 = vunpack.c.l.b16 %v928
        %v1319 = vunpack.c.h.b16 %v928
        %v1320 = vunpack.c.l.b16 %v929
        %v1321 = vunpack.c.h.b16 %v929
        %v1322 = vunpack.c.l.b16 %v930
        %v1323 = vunpack.c.h.b16 %v930
        %v1324 = vunpack.c.l.b16 %v931
        %v1325 = vunpack.c.h.b16 %v931
        %v1326 = vunpack.c.l.b16 %v932
        %v1327 = vunpack.c.h.b16 %v932
        %v1328 = vunpack.c.l.b16 %v933
        %v1329 = vunpack.c.h.b16 %v933
        %v1330 = vunpack.c.l.b16 %v934
        %v1331 = vunpack.c.h.b16 %v934
        %v1332 = vunpack.c.l.b16 %v935
        %v1333 = vunpack.c.h.b16 %v935
        %v1334 = vunpack.c.l.b16 %v936
        %v1335 = vunpack.c.h.b16 %v936
        %v1336 = vunpack.c.l.b16 %v937
        %v1337 = vunpack.c.h.b16 %v937
        %v1338 = vunpack.c.l.b16 %v938
        %v1339 = vunpack.c.h.b16 %v938
        %v1340 = vunpack.c.l.b16 %v939
        %v1341 = vunpack.c.h.b16 %v939
        %v1342 = vunpack.c.l.b16 %v940
        %v1343 = vunpack.c.h.b16 %v940
        %v1344 = vunpack.c.l.b16 %v941
        %v1345 = vunpack.c.h.b16 %v941
        %v1346 = vunpack.c.l.b16 %v942
        %v1347 = vunpack.c.h.b16 %v942
        %v1348 = vunpack.c.l.b16 %v943
        %v1349 = vunpack.c.h.b16 %v943
        %v1350 = vunpack.c.l.b16 %v944
        %v1351 = vunpack.c.h.b16 %v944
        %v1352 = vunpack.c.l.b16 %v945
        %v1353 = vunpack.c.h.b16 %v945
        %v1354 = vunpack.c.l.b16 %v946
        %v1355 = vunpack.c.h.b16 %v946
        %v1356 = vunpack.c.l.b16 %v947
        %v1357 = vunpack.c.h.b16 %v947
        %v1358 = vunpack.c.l.b16 %v948
        %v1359 = vunpack.c.h.b16 %v948
        %v1360 = vunpack.c.l.b16 %v949
        %v1361 = vunpack.c.h.b16 %v949
        %v1362 = vunpack.c.l.b16 %v950
        %v1363 = vunpack.c.h.b16 %v950
        %v1364 = vunpack.c.l.b16 %v951
        %v1365 = vunpack.c.h.b16 %v951
        %v1366 = vunpack.c.l.b16 %v952
        %v1367 = vunpack.c.h.b16 %v952
        %v1368 = vunpack.c.l.b16 %v953
        %v1369 = vunpack.c.h.b16 %v953
        %v1370 = vunpack.c.l.b16 %v954
        %v1371 = vunpack.c.h.b16 %v954
        %v1372 = vunpack.c.l.b16 %v955
        %v1373 = vunpack.c.h.b16 %v955
        %v1374 = vunpack.c.l.b16 %v956
        %v1375 = vunpack.c.h.b16 %v956
        %v1376 = vunpack.c.l.b16 %v957
        %v1377 = vunpack.c.h.b16 %v957
        %v1378 = vunpack.c.l.b16 %v958
        %v1379 = vunpack.c.h.b16 %v958
        %v1380 = vunpack.c.l.b16 %v959
        %v1381 = vunpack.c.h.b16 %v959
        %v1382 = vunpack.c.l.b16 %v960
        %v1383 = vunpack.c.h.b16 %v960
        %v1384 = vunpack.c.l.b16 %v961
        %v1385 = vunpack.c.h.b16 %v961
        %v1386 = vunpack.c.l.b16 %v962
        %v1387 = vunpack.c.h.b16 %v962
        %v1388 = vunpack.c.l.b16 %v963
        %v1389 = vunpack.c.h.b16 %v963
        %v1390 = vunpack.c.l.b16 %v964
        %v1391 = vunpack.c.h.b16 %v964
        %v1392 = vunpack.c.l.b16 %v965
        %v1393 = vunpack.c.h.b16 %v965
        %v1394 = vunpack.c.l.b16 %v966
        %v1395 = vunpack.c.h.b16 %v966
        %v1396 = vunpack.c.l.b16 %v967
        %v1397 = vunpack.c.h.b16 %v967
        %v1398 = vunpack.c.l.b16 %v968
        %v1399 = vunpack.c.h.b16 %v968
        %v1400 = vunpack.c.l.b16 %v969
        %v1401 = vunpack.c.h.b16 %v969
        %v1402 = vunpack.c.l.b16 %v970
        %v1403 = vunpack.c.h.b16 %v970
        %v1404 = vunpack.c.l.b16 %v971
        %v1405 = vunpack.c.h.b16 %v971
        %v1406 = vunpack.c.l.b16 %v972
        %v1407 = vunpack.c.h.b16 %v972
        %v1408 = vunpack.c.l.b16 %v973
        %v1409 = vunpack.c.h.b16 %v973
        %v1410 = vunpack.c.l.b16 %v974
        %v1411 = vunpack.c.h.b16 %v974
        %v1412 = vunpack.c.l.b16 %v975
        %v1413 = vunpack.c.h.b16 %v975
        %v1414 = vunpack.c.l.b16 %v976
        %v1415 = vunpack.c.h.b16 %v976
        %v1416 = vunpack.c.l.b16 %v977
        %v1417 = vunpack.c.h.b16 %v977
        %v1418 = vunpack.c.l.b16 %v978
        %v1419 = vunpack.c.h.b16 %v978
        %v1420 = vunpack.c.l.b16 %v979
        %v1421 = vunpack.c.h.b16 %v979
        %v1422 = vunpack.c.l.b16 %v980
        %v1423 = vunpack.c.h.b16 %v980
        %v1424 = vunpack.c.l.b16 %v981
        %v1425 = vunpack.c.h.b16 %v981
        %v1426 = vunpack.c.l.b16 %v982
        %v1427 = vunpack.c.h.b16 %v982
        %v1428 = vunpack.c.l.b16 %v983
        %v1429 = vunpack.c.h.b16 %v983
        %v1430 = vunpack.c.l.b16 %v984
        %v1431 = vunpack.c.h.b16 %v984
        %v1432 = vunpack.c.l.b16 %v985
        %v1433 = vunpack.c.h.b16 %v985
        %v1434 = vunpack.c.l.b16 %v986
        %v1435 = vunpack.c.h.b16 %v986
        %v1436 = vunpack.c.l.b16 %v987
        %v1437 = vunpack.c.h.b16 %v987
        %v1438 = vunpack.c.l.b16 %v988
        %v1439 = vunpack.c.h.b16 %v988
        %v1440 = vunpack.c.l.b16 %v989
        %v1441 = vunpack.c.h.b16 %v989
        %v1442 = vunpack.c.l.b16 %v990
        %v1443 = vunpack.c.h.b16 %v990
        %v1444 = vunpack.c.l.b16 %v991
        %v1445 = vunpack.c.h.b16 %v991
        %v1446 = vunpack.c.l.b16 %v992
        %v1447 = vunpack.c.h.b16 %v992
        %v1448 = vunpack.c.l.b16 %v993
        %v1449 = vunpack.c.h.b16 %v993
        %v1450 = vunpack.c.l.b16 %v994
        %v1451 = vunpack.c.h.b16 %v994
        %v1452 = vunpack.c.l.b16 %v995
        %v1453 = vunpack.c.h.b16 %v995
        %v1454 = vunpack.c.l.b16 %v996
        %v1455 = vunpack.c.h.b16 %v996
        %v1456 = vunpack.c.l.b16 %v997
        %v1457 = vunpack.c.h.b16 %v997
        %v1458 = vunpack.c.l.b16 %v998
        %v1459 = vunpack.c.h.b16 %v998
        %v1460 = vunpack.c.l.b16 %v999
        %v1461 = vunpack.c.h.b16 %v999
        %v1462 = vunpack.c.l.b16 %v1000
        %v1463 = vunpack.c.h.b16 %v1000
        %v1464 = vunpack.c.l.b16 %v1001
        %v1465 = vunpack.c.h.b16 %v1001
        %v1466 = vunpack.c.l.b16 %v1002
        %v1467 = vunpack.c.h.b16 %v1002
        %v1468 = vunpack.c.l.b16 %v1003
        %v1469 = vunpack.c.h.b16 %v1003
        %v1470 = vunpack.c.l.b16 %v1004
        %v1471 = vunpack.c.h.b16 %v1004
        %v1472 = vunpack.c.l.b16 %v1005
        %v1473 = vunpack.c.h.b16 %v1005
        %v1474 = vunpack.c.l.b16 %v1006
        %v1475 = vunpack.c.h.b16 %v1006
        %v1476 = vunpack.c.l.b16 %v1007
        %v1477 = vunpack.c.h.b16 %v1007
        %v1478 = vunpack.c.l.b16 %v1008
        %v1479 = vunpack.c.h.b16 %v1008
        %v1480 = vunpack.c.l.b16 %v1009
        %v1481 = vunpack.c.h.b16 %v1009
        %v1482 = vunpack.c.l.b16 %v1010
        %v1483 = vunpack.c.h.b16 %v1010
        %v1484 = vunpack.c.l.b16 %v1011
        %v1485 = vunpack.c.h.b16 %v1011
        %v1486 = vunpack.c.l.b16 %v1012
        %v1487 = vunpack.c.h.b16 %v1012
        %v1488 = vunpack.c.l.b16 %v1013
        %v1489 = vunpack.c.h.b16 %v1013
        %v1490 = vunpack.c.l.b16 %v1014
        %v1491 = vunpack.c.h.b16 %v1014
        %v1492 = vunpack.c.l.b16 %v1015
        %v1493 = vunpack.c.h.b16 %v1015
        %v1494 = vunpack.c.l.b16 %v1016
        %v1495 = vunpack.c.h.b16 %v1016
        %v1496 = vunpack.c.l.b16 %v1017
        %v1497 = vunpack.c.h.b16 %v1017
        %v1498 = vunpack.c.l.b16 %v1018
        %v1499 = vunpack.c.h.b16 %v1018
        %v1500 = vunpack.c.l.b16 %v1019
        %v1501 = vunpack.c.h.b16 %v1019
        %v1502 = vunpack.c.l.b16 %v1020
        %v1503 = vunpack.c.h.b16 %v1020
        %v1504 = vunpack.c.l.b16 %v1021
        %v1505 = vunpack.c.h.b16 %v1021
        %v1506 = vunpack.c.l.b16 %v1022
        %v1507 = vunpack.c.h.b16 %v1022
        %v1508 = vunpack.c.l.b16 %v1023
        %v1509 = vunpack.c.h.b16 %v1023
        %v1510 = vunpack.c.l.b16 %v1024
        %v1511 = vunpack.c.h.b16 %v1024
        %v1512 = vunpack.c.l.b16 %v1025
        %v1513 = vunpack.c.h.b16 %v1025
        %v1514 = vunpack.c.l.b16 %v1026
        %v1515 = vunpack.c.h.b16 %v1026
        %v1516 = vunpack.c.l.b16 %v1027
        %v1517 = vunpack.c.h.b16 %v1027
        %v1518 = vunpack.c.l.b16 %v1028
        %v1519 = vunpack.c.h.b16 %v1028
        %v1520 = vunpack.c.l.b16 %v1029
        %v1521 = vunpack.c.h.b16 %v1029
        %v1522 = vunpack.c.l.b16 %v1030
        %v1523 = vunpack.c.h.b16 %v1030
        %v1524 = vunpack.c.l.b16 %v1031
        %v1525 = vunpack.c.h.b16 %v1031
        %v1526 = vunpack.c.l.b16 %v1032
        %v1527 = vunpack.c.h.b16 %v1032
        %v1528 = vunpack.c.l.b16 %v1033
        %v1529 = vunpack.c.h.b16 %v1033
        %v1530 = vunpack.c.l.b16 %v1034
        %v1531 = vunpack.c.h.b16 %v1034
        %v1532 = vunpack.c.l.b16 %v1035
        %v1533 = vunpack.c.h.b16 %v1035
        %v1534 = vunpack.c.l.b16 %v1036
        %v1535 = vunpack.c.h.b16 %v1036
        %v1536 = vunpack.c.l.b16 %v1037
        %v1537 = vunpack.c.h.b16 %v1037
        %v1538 = vunpack.c.l.b16 %v1038
        %v1539 = vunpack.c.h.b16 %v1038
        %v1540 = vunpack.c.l.b16 %v1039
        %v1541 = vunpack.c.h.b16 %v1039
        %v1542 = vunpack.c.l.b16 %v1040
        %v1543 = vunpack.c.h.b16 %v1040
        %v1544 = vunpack.c.l.b16 %v1041
        %v1545 = vunpack.c.h.b16 %v1041
        %v1546 = vunpack.c.l.b16 %v1042
        %v1547 = vunpack.c.h.b16 %v1042
        %v1548 = vunpack.c.l.b16 %v1043
        %v1549 = vunpack.c.h.b16 %v1043
        %v1550 = vunpack.c.l.b16 %v1044
        %v1551 = vunpack.c.h.b16 %v1044
        %v1552 = vunpack.c.l.b16 %v1045
        %v1553 = vunpack.c.h.b16 %v1045
        %v1554 = vunpack.c.l.b16 %v1046
        %v1555 = vunpack.c.h.b16 %v1046
        %v1556 = vunpack.c.l.b16 %v1047
        %v1557 = vunpack.c.h.b16 %v1047
        %v1558 = vunpack.c.l.b16 %v1048
        %v1559 = vunpack.c.h.b16 %v1048
        %v1560 = vunpack.c.l.b16 %v1049
        %v1561 = vunpack.c.h.b16 %v1049
        %v1562 = vunpack.c.l.b16 %v1050
        %v1563 = vunpack.c.h.b16 %v1050
        %v1564 = vunpack.c.l.b16 %v1051
        %v1565 = vunpack.c.h.b16 %v1051
        %v1566 = vunpack.c.l.b16 %v1052
        %v1567 = vunpack.c.h.b16 %v1052
        %v1568 = vunpack.c.l.b16 %v1053
        %v1569 = vunpack.c.h.b16 %v1053
        %v1570 = vunpack.c.l.b16 %v1054
        %v1571 = vunpack.c.h.b16 %v1054
        %v1572 = vunpack.c.l.b16 %v1055
        %v1573 = vunpack.c.h.b16 %v1055
        %v1574 = vunpack.c.l.b16 %v1056
        %v1575 = vunpack.c.h.b16 %v1056
        %v1576 = vunpack.c.l.b16 %v1057
        %v1577 = vunpack.c.h.b16 %v1057
        %v1578 = vunpack.c.l.b16 %v1058
        %v1579 = vunpack.c.h.b16 %v1058
        %v1580 = vunpack.c.l.b16 %v1059
        %v1581 = vunpack.c.h.b16 %v1059
        %v1582 = vunpack.c.l.b16 %v1060
        %v1583 = vunpack.c.h.b16 %v1060
        %v1584 = vunpack.c.l.b16 %v1061
        %v1585 = vunpack.c.h.b16 %v1061
        %v1586 = vunpack.c.l.b16 %v1062
        %v1587 = vunpack.c.h.b16 %v1062
        %v1588 = vunpack.c.l.b16 %v1063
        %v1589 = vunpack.c.h.b16 %v1063
        %v1590 = vunpack.c.l.b16 %v1064
        %v1591 = vunpack.c.h.b16 %v1064
        %v1592 = vunpack.c.l.b16 %v1065
        %v1593 = vunpack.c.h.b16 %v1065
        %v1594 = vunpack.c.l.b16 %v1066
        %v1595 = vunpack.c.h.b16 %v1066
        %v1596 = vunpack.c.l.b16 %v1067
        %v1597 = vunpack.c.h.b16 %v1067
        %v1598 = vunpack.c.l.b16 %v1068
        %v1599 = vunpack.c.h.b16 %v1068
        %v1600 = vunpack.c.l.b16 %v1069
        %v1601 = vunpack.c.h.b16 %v1069
        %v1602 = vunpack.c.l.b16 %v1070
        %v1603 = vunpack.c.h.b16 %v1070
        %v1604 = vunpack.c.l.b16 %v1071
        %v1605 = vunpack.c.h.b16 %v1071
        %v1606 = vunpack.c.l.b16 %v1072
        %v1607 = vunpack.c.h.b16 %v1072
        %v1608 = vunpack.c.l.b16 %v1073
        %v1609 = vunpack.c.h.b16 %v1073
        %v1610 = vunpack.c.l.b16 %v1074
        %v1611 = vunpack.c.h.b16 %v1074
        %v1612 = vunpack.c.l.b16 %v1075
        %v1613 = vunpack.c.h.b16 %v1075
        %v1614 = vunpack.c.l.b16 %v1076
        %v1615 = vunpack.c.h.b16 %v1076
        %v1616 = vunpack.c.l.b16 %v1077
        %v1617 = vunpack.c.h.b16 %v1077
        %v1618 = vunpack.c.l.b16 %v1078
        %v1619 = vunpack.c.h.b16 %v1078
        %v1620 = vunpack.c.l.b16 %v1079
        %v1621 = vunpack.c.h.b16 %v1079
        %v1622 = vunpack.c.l.b16 %v1080
        %v1623 = vunpack.c.h.b16 %v1080
        %v1624 = vunpack.c.l.b16 %v1081
        %v1625 = vunpack.c.h.b16 %v1081
        %v1626 = vunpack.c.l.b16 %v1082
        %v1627 = vunpack.c.h.b16 %v1082
        %v1628 = vunpack.c.l.b16 %v1083
        %v1629 = vunpack.c.h.b16 %v1083
        %v1630 = vunpack.c.l.b16 %v1084
        %v1631 = vunpack.c.h.b16 %v1084
        %v1632 = vunpack.c.l.b16 %v1085
        %v1633 = vunpack.c.h.b16 %v1085
        %v1634 = vunpack.c.l.b16 %v1086
        %v1635 = vunpack.c.h.b16 %v1086
        %v1636 = vunpack.c.l.b16 %v1087
        %v1637 = vunpack.c.h.b16 %v1087
        %v1638 = vunpack.c.l.b16 %v1088
        %v1639 = vunpack.c.h.b16 %v1088
        %v1640 = vunpack.c.l.b16 %v1089
        %v1641 = vunpack.c.h.b16 %v1089
        %v1642 = vunpack.c.l.b16 %v1090
        %v1643 = vunpack.c.h.b16 %v1090
        %v1644 = vunpack.c.l.b16 %v1091
        %v1645 = vunpack.c.h.b16 %v1091
        %v1646 = vunpack.c.l.b16 %v1092
        %v1647 = vunpack.c.h.b16 %v1092
        %v1648 = vunpack.c.l.b16 %v1093
        %v1649 = vunpack.c.h.b16 %v1093
        %v1650 = vunpack.c.l.b16 %v1094
        %v1651 = vunpack.c.h.b16 %v1094
        %v1652 = vunpack.c.l.b16 %v1095
        %v1653 = vunpack.c.h.b16 %v1095
        %v1654 = vunpack.c.l.b16 %v1096
        %v1655 = vunpack.c.h.b16 %v1096
        %v1656 = vunpack.c.l.b16 %v1097
        %v1657 = vunpack.c.h.b16 %v1097
        %v1658 = vunpack.c.l.b16 %v1098
        %v1659 = vunpack.c.h.b16 %v1098
        %v1660 = vunpack.c.l.b16 %v1099
        %v1661 = vunpack.c.h.b16 %v1099
        %v1662 = vunpack.c.l.b16 %v1100
        %v1663 = vunpack.c.h.b16 %v1100
        %v1664 = vunpack.c.l.b16 %v1101
        %v1665 = vunpack.c.h.b16 %v1101
        %v1666 = vunpack.c.l.b16 %v1102
        %v1667 = vunpack.c.h.b16 %v1102
        %v1668 = vunpack.c.l.b16 %v1103
        %v1669 = vunpack.c.h.b16 %v1103
        %v1670 = vunpack.c.l.b16 %v1104
        %v1671 = vunpack.c.h.b16 %v1104
        %v1672 = vunpack.c.l.b16 %v1105
        %v1673 = vunpack.c.h.b16 %v1105
        %v1674 = vunpack.c.l.b16 %v1106
        %v1675 = vunpack.c.h.b16 %v1106
        %v1676 = vunpack.c.l.b16 %v1107
        %v1677 = vunpack.c.h.b16 %v1107
        %v1678 = vunpack.c.l.b16 %v1108
        %v1679 = vunpack.c.h.b16 %v1108
        %v1680 = vunpack.c.l.b16 %v1109
        %v1681 = vunpack.c.h.b16 %v1109
        %v1682 = vunpack.c.l.b16 %v1110
        %v1683 = vunpack.c.h.b16 %v1110
        %v1684 = vunpack.c.l.b16 %v1111
        %v1685 = vunpack.c.h.b16 %v1111
        %v1686 = vunpack.c.l.b16 %v1112
        %v1687 = vunpack.c.h.b16 %v1112
        %v1688 = vunpack.c.l.b16 %v1113
        %v1689 = vunpack.c.h.b16 %v1113
        %v1690 = vpack.c.b16 %v1314, %v1306
        %v1691 = vpack.c.b16 %v1315, %v1307
        %v1692 = vpack.c.b16 %v1316, %v1308
        %v1693 = vpack.c.b16 %v1317, %v1309
        %v1694 = vpack.c.b16 %v1318, %v1310
        %v1695 = vpack.c.b16 %v1319, %v1311
        %v1696 = vpack.c.b16 %v1320, %v1312
        %v1697 = vpack.c.b16 %v1321, %v1313
        %v1698 = vpack.c.b16 %v1330, %v1322
        %v1699 = vpack.c.b16 %v1331, %v1323
        %v1700 = vpack.c.b16 %v1332, %v1324
        %v1701 = vpack.c.b16 %v1333, %v1325
        %v1702 = vpack.c.b16 %v1334, %v1326
        %v1703 = vpack.c.b16 %v1335, %v1327
        %v1704 = vpack.c.b16 %v1336, %v1328
        %v1705 = vpack.c.b16 %v1337, %v1329
        %v1706 = vpack.c.b16 %v1346, %v1338
        %v1707 = vpack.c.b16 %v1347, %v1339
        %v1708 = vpack.c.b16 %v1348, %v1340
        %v1709 = vpack.c.b16 %v1349, %v1341
        %v1710 = vpack.c.b16 %v1350, %v1342
        %v1711 = vpack.c.b16 %v1351, %v1343
        %v1712 = vpack.c.b16 %v1352, %v1344
        %v1713 = vpack.c.b16 %v1353, %v1345
        %v1714 = vpack.c.b16 %v1362, %v1354
        %v1715 = vpack.c.b16 %v1363, %v1355
        %v1716 = vpack.c.b16 %v1364, %v1356
        %v1717 = vpack.c.b16 %v1365, %v1357
        %v1718 = vpack.c.b16 %v1366, %v1358
        %v1719 = vpack.c.b16 %v1367, %v1359
        %v1720 = vpack.c.b16 %v1368, %v1360
        %v1721 = vpack.c.b16 %v1369, %v1361
        %v1722 = vpack.c.b16 %v1378, %v1370
        %v1723 = vpack.c.b16 %v1379, %v1371
        %v1724 = vpack.c.b16 %v1380, %v1372
        %v1725 = vpack.c.b16 %v1381, %v1373
        %v1726 = vpack.c.b16 %v1382, %v1374
        %v1727 = vpack.c.b16 %v1383, %v1375
        %v1728 = vpack.c.b16 %v1384, %v1376
        %v1729 = vpack.c.b16 %v1385, %v1377
        %v1730 = vpack.c.b16 %v1394, %v1386
        %v1731 = vpack.c.b16 %v1395, %v1387
        %v1732 = vpack.c.b16 %v1396, %v1388
        %v1733 = vpack.c.b16 %v1397, %v1389
        %v1734 = vpack.c.b16 %v1398, %v1390
        %v1735 = vpack.c.b16 %v1399, %v1391
        %v1736 = vpack.c.b16 %v1400, %v1392
        %v1737 = vpack.c.b16 %v1401, %v1393
        %v1738 = vpack.c.b16 %v1410, %v1402
        %v1739 = vpack.c.b16 %v1411, %v1403
        %v1740 = vpack.c.b16 %v1412, %v1404
        %v1741 = vpack.c.b16 %v1413, %v1405
        %v1742 = vpack.c.b16 %v1414, %v1406
        %v1743 = vpack.c.b16 %v1415, %v1407
        %v1744 = vpack.c.b16 %v1416, %v1408
        %v1745 = vpack.c.b16 %v1417, %v1409
        %v1746 = vpack.c.b16 %v1426, %v1418
        %v1747 = vpack.c.b16 %v1427, %v1419
        %v1748 = vpack.c.b16 %v1428, %v1420
        %v1749 = vpack.c.b16 %v1429, %v1421
        %v1750 = vpack.c.b16 %v1430, %v1422
        %v1751 = vpack.c.b16 %v1431, %v1423
        %v1752 = vpack.c.b16 %v1432, %v1424
        %v1753 = vpack.c.b16 %v1433, %v1425
        %v1754 = vpack.c.b16 %v1442, %v1434
        %v1755 = vpack.c.b16 %v1443, %v1435
        %v1756 = vpack.c.b16 %v1444, %v1436
        %v1757 = vpack.c.b16 %v1445, %v1437
        %v1758 = vpack.c.b16 %v1446, %v1438
        %v1759 = vpack.c.b16 %v1447, %v1439
        %v1760 = vpack.c.b16 %v1448, %v1440
        %v1761 = vpack.c.b16 %v1449, %v1441
        %v1762 = vpack.c.b16 %v1458, %v1450
        %v1763 = vpack.c.b16 %v1459, %v1451
        %v1764 = vpack.c.b16 %v1460, %v1452
        %v1765 = vpack.c.b16 %v1461, %v1453
        %v1766 = vpack.c.b16 %v1462, %v1454
        %v1767 = vpack.c.b16 %v1463, %v1455
        %v1768 = vpack.c.b16 %v1464, %v1456
        %v1769 = vpack.c.b16 %v1465, %v1457
        %v1770 = vpack.c.b16 %v1474, %v1466
        %v1771 = vpack.c.b16 %v1475, %v1467
        %v1772 = vpack.c.b16 %v1476, %v1468
        %v1773 = vpack.c.b16 %v1477, %v1469
        %v1774 = vpack.c.b16 %v1478, %v1470
        %v1775 = vpack.c.b16 %v1479, %v1471
        %v1776 = vpack.c.b16 %v1480, %v1472
        %v1777 = vpack.c.b16 %v1481, %v1473
        %v1778 = vpack.c.b16 %v1490, %v1482
        %v1779 = vpack.c.b16 %v1491, %v1483
        %v1780 = vpack.c.b16 %v1492, %v1484
        %v1781 = vpack.c.b16 %v1493, %v1485
        %v1782 = vpack.c.b16 %v1494, %v1486
        %v1783 = vpack.c.b16 %v1495, %v1487
        %v1784 = vpack.c.b16 %v1496, %v1488
        %v1785 = vpack.c.b16 %v1497, %v1489
        %v1786 = vpack.c.b16 %v1506, %v1498
        %v1787 = vpack.c.b16 %v1507, %v1499
        %v1788 = vpack.c.b16 %v1508, %v1500
        %v1789 = vpack.c.b16 %v1509, %v1501
        %v1790 = vpack.c.b16 %v1510, %v1502
        %v1791 = vpack.c.b16 %v1511, %v1503
        %v1792 = vpack.c.b16 %v1512, %v1504
        %v1793 = vpack.c.b16 %v1513, %v1505
        %v1794 = vpack.c.b16 %v1522, %v1514
        %v1795 = vpack.c.b16 %v1523, %v1515
        %v1796 = vpack.c.b16 %v1524, %v1516
        %v1797 = vpack.c.b16 %v1525, %v1517
        %v1798 = vpack.c.b16 %v1526, %v1518
        %v1799 = vpack.c.b16 %v1527, %v1519
        %v1800 = vpack.c.b16 %v1528, %v1520
        %v1801 = vpack.c.b16 %v1529, %v1521
        %v1802 = vpack.c.b16 %v1538, %v1530
        %v1803 = vpack.c.b16 %v1539, %v1531
        %v1804 = vpack.c.b16 %v1540, %v1532
        %v1805 = vpack.c.b16 %v1541, %v1533
        %v1806 = vpack.c.b16 %v1542, %v1534
        %v1807 = vpack.c.b16 %v1543, %v1535
        %v1808 = vpack.c.b16 %v1544, %v1536
        %v1809 = vpack.c.b16 %v1545, %v1537
        %v1810 = vpack.c.b16 %v1554, %v1546
        %v1811 = vpack.c.b16 %v1555, %v1547
        %v1812 = vpack.c.b16 %v1556, %v1548
        %v1813 = vpack.c.b16 %v1557, %v1549
        %v1814 = vpack.c.b16 %v1558, %v1550
        %v1815 = vpack.c.b16 %v1559, %v1551
        %v1816 = vpack.c.b16 %v1560, %v1552
        %v1817 = vpack.c.b16 %v1561, %v1553
        %v1818 = vpack.c.b16 %v1570, %v1562
        %v1819 = vpack.c.b16 %v1571, %v1563
        %v1820 = vpack.c.b16 %v1572, %v1564
        %v1821 = vpack.c.b16 %v1573, %v1565
        %v1822 = vpack.c.b16 %v1574, %v1566
        %v1823 = vpack.c.b16 %v1575, %v1567
        %v1824 = vpack.c.b16 %v1576, %v1568
        %v1825 = vpack.c.b16 %v1577, %v1569
        %v1826 = vpack.c.b16 %v1586, %v1578
        %v1827 = vpack.c.b16 %v1587, %v1579
        %v1828 = vpack.c.b16 %v1588, %v1580
        %v1829 = vpack.c.b16 %v1589, %v1581
        %v1830 = vpack.c.b16 %v1590, %v1582
        %v1831 = vpack.c.b16 %v1591, %v1583
        %v1832 = vpack.c.b16 %v1592, %v1584
        %v1833 = vpack.c.b16 %v1593, %v1585
        %v1834 = vpack.c.b16 %v1602, %v1594
        %v1835 = vpack.c.b16 %v1603, %v1595
        %v1836 = vpack.c.b16 %v1604, %v1596
        %v1837 = vpack.c.b16 %v1605, %v1597
        %v1838 = vpack.c.b16 %v1606, %v1598
        %v1839 = vpack.c.b16 %v1607, %v1599
        %v1840 = vpack.c.b16 %v1608, %v1600
        %v1841 = vpack.c.b16 %v1609, %v1601
        %v1842 = vpack.c.b16 %v1618, %v1610
        %v1843 = vpack.c.b16 %v1619, %v1611
        %v1844 = vpack.c.b16 %v1620, %v1612
        %v1845 = vpack.c.b16 %v1621, %v1613
        %v1846 = vpack.c.b16 %v1622, %v1614
        %v1847 = vpack.c.b16 %v1623, %v1615
        %v1848 = vpack.c.b16 %v1624, %v1616
        %v1849 = vpack.c.b16 %v1625, %v1617
        %v1850 = vpack.c.b16 %v1634, %v1626
        %v1851 = vpack.c.b16 %v1635, %v1627
        %v1852 = vpack.c.b16 %v1636, %v1628
        %v1853 = vpack.c.b16 %v1637, %v1629
        %v1854 = vpack.c.b16 %v1638, %v1630
        %v1855 = vpack.c.b16 %v1639, %v1631
        %v1856 = vpack.c.b16 %v1640, %v1632
        %v1857 = vpack.c.b16 %v1641, %v1633
        %v1858 = vpack.c.b16 %v1650, %v1642
        %v1859 = vpack.c.b16 %v1651, %v1643
        %v1860 = vpack.c.b16 %v1652, %v1644
        %v1861 = vpack.c.b16 %v1653, %v1645
        %v1862 = vpack.c.b16 %v1654, %v1646
        %v1863 = vpack.c.b16 %v1655, %v1647
        %v1864 = vpack.c.b16 %v1656, %v1648
        %v1865 = vpack.c.b16 %v1657, %v1649
        %v1866 = vpack.c.b16 %v1666, %v1658
        %v1867 = vpack.c.b16 %v1667, %v1659
        %v1868 = vpack.c.b16 %v1668, %v1660
        %v1869 = vpack.c.b16 %v1669, %v1661
        %v1870 = vpack.c.b16 %v1670, %v1662
        %v1871 = vpack.c.b16 %v1671, %v1663
        %v1872 = vpack.c.b16 %v1672, %v1664
        %v1873 = vpack.c.b16 %v1673, %v1665
        %v1874 = vpack.c.b16 %v1682, %v1674
        %v1875 = vpack.c.b16 %v1683, %v1675
        %v1876 = vpack.c.b16 %v1684, %v1676
        %v1877 = vpack.c.b16 %v1685, %v1677
        %v1878 = vpack.c.b16 %v1686, %v1678
        %v1879 = vpack.c.b16 %v1687, %v1679
        %v1880 = vpack.c.b16 %v1688, %v1680
        %v1881 = vpack.c.b16 %v1689, %v1681
        %2074 = vmatprep.subr.bf16.mxu0 %v1691
        %2075 = vmatpush1.bf16.msra.mxu0 %v1690
        %2076 = vmatprep.subr.bf16.mxu0 %v1699
        %2077 = vmatpush1.bf16.msra.mxu0 %v1698
        %2078 = vmatprep.subr.bf16.mxu0 %v1707
        %2079 = vmatpush1.bf16.msra.mxu0 %v1706
        %2080 = vmatprep.subr.bf16.mxu0 %v1715
        %2081 = vmatpush1.bf16.msra.mxu0 %v1714
        %2082 = vmatprep.subr.bf16.mxu0 %v1723
        %2083 = vmatpush1.bf16.msra.mxu0 %v1722
        %2084 = vmatprep.subr.bf16.mxu0 %v1731
        %2085 = vmatpush1.bf16.msra.mxu0 %v1730
        %2086 = vmatprep.subr.bf16.mxu0 %v1739
        %2087 = vmatpush1.bf16.msra.mxu0 %v1738
        %2088 = vmatprep.subr.bf16.mxu0 %v1747
        %2089 = vmatpush1.bf16.msra.mxu0 %v1746
        %2090 = vmatprep.subr.bf16.mxu0 %v1755
        %2091 = vmatpush1.bf16.msra.mxu0 %v1754
        %2092 = vmatprep.subr.bf16.mxu0 %v1763
        %2093 = vmatpush1.bf16.msra.mxu0 %v1762
        %2094 = vmatprep.subr.bf16.mxu0 %v1771
        %2095 = vmatpush1.bf16.msra.mxu0 %v1770
        %2096 = vmatprep.subr.bf16.mxu0 %v1779
        %2097 = vmatpush1.bf16.msra.mxu0 %v1778
        %2098 = vmatprep.subr.bf16.mxu0 %v1787
        %2099 = vmatpush1.bf16.msra.mxu0 %v1786
        %2100 = vmatprep.subr.bf16.mxu0 %v1795
        %2101 = vmatpush1.bf16.msra.mxu0 %v1794
        %2102 = vmatprep.subr.bf16.mxu0 %v1803
        %2103 = vmatpush1.bf16.msra.mxu0 %v1802
        %2104 = vmatprep.subr.bf16.mxu0 %v1811
        %2105 = vmatpush1.bf16.msra.mxu0 %v1810
        %2106 = vmatprep.mubr.bf16.mxu0 %v920
        %2107 = vmatmul.mubr.bf16.gmra.mrb[0].mxu0 %v919
        %v2108 = vpop.f32.mrb[0].mxu0
        %v2109 = vadd.f32 0.0, %v2108
        %v2110 = vpop.f32.mrb[0].mxu0
        %v2111 = vadd.f32 0.0, %v2110
        %v2112 = vpop.f32.mrb[0].mxu0
        %v2113 = vadd.f32 0.0, %v2112
        %v2114 = vpop.f32.mrb[0].mxu0
        %v2115 = vadd.f32 0.0, %v2114
        %2116 = vdwg.mxu0
        %2117 = vmatprep.subr.bf16.mxu0 %v1819
        %2118 = vmatpush1.bf16.msra.mxu0 %v1818
        %2119 = vmatprep.subr.bf16.mxu0 %v1827
        %2120 = vmatpush1.bf16.msra.mxu0 %v1826
        %2121 = vmatprep.subr.bf16.mxu0 %v1835
        %2122 = vmatpush1.bf16.msra.mxu0 %v1834
        %2123 = vmatprep.subr.bf16.mxu0 %v1843
        %2124 = vmatpush1.bf16.msra.mxu0 %v1842
        %2125 = vmatprep.subr.bf16.mxu0 %v1851
        %2126 = vmatpush1.bf16.msra.mxu0 %v1850
        %2127 = vmatprep.subr.bf16.mxu0 %v1859
        %2128 = vmatpush1.bf16.msra.mxu0 %v1858
        %2129 = vmatprep.subr.bf16.mxu0 %v1867
        %2130 = vmatpush1.bf16.msra.mxu0 %v1866
        %2131 = vmatprep.subr.bf16.mxu0 %v1875
        %2132 = vmatpush1.bf16.msra.mxu0 %v1874
        %2133 = vmatprep.subr.bf16.mxu0 0
        %2134 = vmatpush1.bf16.msra.mxu0 0
        %2135 = vmatprep.subr.bf16.mxu0 0
        %2136 = vmatpush1.bf16.msra.mxu0 0
        %2137 = vmatprep.subr.bf16.mxu0 0
        %2138 = vmatpush1.bf16.msra.mxu0 0
        %2139 = vmatprep.subr.bf16.mxu0 0
        %2140 = vmatpush1.bf16.msra.mxu0 0
        %2141 = vmatprep.subr.bf16.mxu0 0
        %2142 = vmatpush1.bf16.msra.mxu0 0
        %2143 = vmatprep.subr.bf16.mxu0 0
        %2144 = vmatpush1.bf16.msra.mxu0 0
        %2145 = vmatprep.subr.bf16.mxu0 0
        %2146 = vmatpush1.bf16.msra.mxu0 0
        %2147 = vmatprep.subr.bf16.mxu0 0
        %2148 = vmatpush1.bf16.msra.mxu0 0
        %2149 = vmatprep.mubr.bf16.mxu0 0
        %2150 = vmatmul.mubr.bf16.gmra.mrb[0].mxu0 %v921
        %v2151 = vpop.f32.mrb[0].mxu0
        %v2152 = vadd.f32 %v2109, %v2151
        %v2153 = vpop.f32.mrb[0].mxu0
        %v2154 = vadd.f32 %v2111, %v2153
        %v2155 = vpop.f32.mrb[0].mxu0
        %v2156 = vadd.f32 %v2113, %v2155
        %v2157 = vpop.f32.mrb[0].mxu0
        %v2158 = vadd.f32 %v2115, %v2157
        %2159 = vdwg.mxu0
        %2160 = vmatprep.subr.bf16.mxu0 %v1693
        %2161 = vmatpush1.bf16.msra.mxu0 %v1692
        %2162 = vmatprep.subr.bf16.mxu0 %v1701
        %2163 = vmatpush1.bf16.msra.mxu0 %v1700
        %2164 = vmatprep.subr.bf16.mxu0 %v1709
        %2165 = vmatpush1.bf16.msra.mxu0 %v1708
        %2166 = vmatprep.subr.bf16.mxu0 %v1717
        %2167 = vmatpush1.bf16.msra.mxu0 %v1716
        %2168 = vmatprep.subr.bf16.mxu0 %v1725
        %2169 = vmatpush1.bf16.msra.mxu0 %v1724
        %2170 = vmatprep.subr.bf16.mxu0 %v1733
        %2171 = vmatpush1.bf16.msra.mxu0 %v1732
        %2172 = vmatprep.subr.bf16.mxu0 %v1741
        %2173 = vmatpush1.bf16.msra.mxu0 %v1740
        %2174 = vmatprep.subr.bf16.mxu0 %v1749
        %2175 = vmatpush1.bf16.msra.mxu0 %v1748
        %2176 = vmatprep.subr.bf16.mxu0 %v1757
        %2177 = vmatpush1.bf16.msra.mxu0 %v1756
        %2178 = vmatprep.subr.bf16.mxu0 %v1765
        %2179 = vmatpush1.bf16.msra.mxu0 %v1764
        %2180 = vmatprep.subr.bf16.mxu0 %v1773
        %2181 = vmatpush1.bf16.msra.mxu0 %v1772
        %2182 = vmatprep.subr.bf16.mxu0 %v1781
        %2183 = vmatpush1.bf16.msra.mxu0 %v1780
        %2184 = vmatprep.subr.bf16.mxu0 %v1789
        %2185 = vmatpush1.bf16.msra.mxu0 %v1788
        %2186 = vmatprep.subr.bf16.mxu0 %v1797
        %2187 = vmatpush1.bf16.msra.mxu0 %v1796
        %2188 = vmatprep.subr.bf16.mxu0 %v1805
        %2189 = vmatpush1.bf16.msra.mxu0 %v1804
        %2190 = vmatprep.subr.bf16.mxu0 %v1813
        %2191 = vmatpush1.bf16.msra.mxu0 %v1812
        %2192 = vmatprep.mubr.bf16.mxu0 %v920
        %2193 = vmatmul.mubr.bf16.gmra.mrb[0].mxu0 %v919
        %v2194 = vpop.f32.mrb[0].mxu0
        %v2195 = vadd.f32 0.0, %v2194
        %v2196 = vpop.f32.mrb[0].mxu0
        %v2197 = vadd.f32 0.0, %v2196
        %v2198 = vpop.f32.mrb[0].mxu0
        %v2199 = vadd.f32 0.0, %v2198
        %v2200 = vpop.f32.mrb[0].mxu0
        %v2201 = vadd.f32 0.0, %v2200
        %2202 = vdwg.mxu0
        %2203 = vmatprep.subr.bf16.mxu0 %v1821
        %2204 = vmatpush1.bf16.msra.mxu0 %v1820
        %2205 = vmatprep.subr.bf16.mxu0 %v1829
        %2206 = vmatpush1.bf16.msra.mxu0 %v1828
        %2207 = vmatprep.subr.bf16.mxu0 %v1837
        %2208 = vmatpush1.bf16.msra.mxu0 %v1836
        %2209 = vmatprep.subr.bf16.mxu0 %v1845
        %2210 = vmatpush1.bf16.msra.mxu0 %v1844
        %2211 = vmatprep.subr.bf16.mxu0 %v1853
        %2212 = vmatpush1.bf16.msra.mxu0 %v1852
        %2213 = vmatprep.subr.bf16.mxu0 %v1861
        %2214 = vmatpush1.bf16.msra.mxu0 %v1860
        %2215 = vmatprep.subr.bf16.mxu0 %v1869
        %2216 = vmatpush1.bf16.msra.mxu0 %v1868
        %2217 = vmatprep.subr.bf16.mxu0 %v1877
        %2218 = vmatpush1.bf16.msra.mxu0 %v1876
        %2219 = vmatprep.subr.bf16.mxu0 0
        %2220 = vmatpush1.bf16.msra.mxu0 0
        %2221 = vmatprep.subr.bf16.mxu0 0
        %2222 = vmatpush1.bf16.msra.mxu0 0
        %2223 = vmatprep.subr.bf16.mxu0 0
        %2224 = vmatpush1.bf16.msra.mxu0 0
        %2225 = vmatprep.subr.bf16.mxu0 0
        %2226 = vmatpush1.bf16.msra.mxu0 0
        %2227 = vmatprep.subr.bf16.mxu0 0
        %2228 = vmatpush1.bf16.msra.mxu0 0
        %2229 = vmatprep.subr.bf16.mxu0 0
        %2230 = vmatpush1.bf16.msra.mxu0 0
        %2231 = vmatprep.subr.bf16.mxu0 0
        %2232 = vmatpush1.bf16.msra.mxu0 0
        %2233 = vmatprep.subr.bf16.mxu0 0
        %2234 = vmatpush1.bf16.msra.mxu0 0
        %2235 = vmatprep.mubr.bf16.mxu0 0
        %2236 = vmatmul.mubr.bf16.gmra.mrb[0].mxu0 %v921
        %v2237 = vpop.f32.mrb[0].mxu0
        %v2238 = vadd.f32 %v2195, %v2237
        %v2239 = vpop.f32.mrb[0].mxu0
        %v2240 = vadd.f32 %v2197, %v2239
        %v2241 = vpop.f32.mrb[0].mxu0
        %v2242 = vadd.f32 %v2199, %v2241
        %v2243 = vpop.f32.mrb[0].mxu0
        %v2244 = vadd.f32 %v2201, %v2243
        %2245 = vdwg.mxu0
        %2246 = vmatprep.subr.bf16.mxu0 %v1695
        %2247 = vmatpush1.bf16.msra.mxu0 %v1694
        %2248 = vmatprep.subr.bf16.mxu0 %v1703
        %2249 = vmatpush1.bf16.msra.mxu0 %v1702
        %2250 = vmatprep.subr.bf16.mxu0 %v1711
        %2251 = vmatpush1.bf16.msra.mxu0 %v1710
        %2252 = vmatprep.subr.bf16.mxu0 %v1719
        %2253 = vmatpush1.bf16.msra.mxu0 %v1718
        %2254 = vmatprep.subr.bf16.mxu0 %v1727
        %2255 = vmatpush1.bf16.msra.mxu0 %v1726
        %2256 = vmatprep.subr.bf16.mxu0 %v1735
        %2257 = vmatpush1.bf16.msra.mxu0 %v1734
        %2258 = vmatprep.subr.bf16.mxu0 %v1743
        %2259 = vmatpush1.bf16.msra.mxu0 %v1742
        %2260 = vmatprep.subr.bf16.mxu0 %v1751
        %2261 = vmatpush1.bf16.msra.mxu0 %v1750
        %2262 = vmatprep.subr.bf16.mxu0 %v1759
        %2263 = vmatpush1.bf16.msra.mxu0 %v1758
        %2264 = vmatprep.subr.bf16.mxu0 %v1767
        %2265 = vmatpush1.bf16.msra.mxu0 %v1766
        %2266 = vmatprep.subr.bf16.mxu0 %v1775
        %2267 = vmatpush1.bf16.msra.mxu0 %v1774
        %2268 = vmatprep.subr.bf16.mxu0 %v1783
        %2269 = vmatpush1.bf16.msra.mxu0 %v1782
        %2270 = vmatprep.subr.bf16.mxu0 %v1791
        %2271 = vmatpush1.bf16.msra.mxu0 %v1790
        %2272 = vmatprep.subr.bf16.mxu0 %v1799
        %2273 = vmatpush1.bf16.msra.mxu0 %v1798
        %2274 = vmatprep.subr.bf16.mxu0 %v1807
        %2275 = vmatpush1.bf16.msra.mxu0 %v1806
        %2276 = vmatprep.subr.bf16.mxu0 %v1815
        %2277 = vmatpush1.bf16.msra.mxu0 %v1814
        %2278 = vmatprep.mubr.bf16.mxu0 %v920
        %2279 = vmatmul.mubr.bf16.gmra.mrb[0].mxu0 %v919
        %v2280 = vpop.f32.mrb[0].mxu0
        %v2281 = vadd.f32 0.0, %v2280
        %v2282 = vpop.f32.mrb[0].mxu0
        %v2283 = vadd.f32 0.0, %v2282
        %v2284 = vpop.f32.mrb[0].mxu0
        %v2285 = vadd.f32 0.0, %v2284
        %v2286 = vpop.f32.mrb[0].mxu0
        %v2287 = vadd.f32 0.0, %v2286
        %2288 = vdwg.mxu0
        %2289 = vmatprep.subr.bf16.mxu0 %v1823
        %2290 = vmatpush1.bf16.msra.mxu0 %v1822
        %2291 = vmatprep.subr.bf16.mxu0 %v1831
        %2292 = vmatpush1.bf16.msra.mxu0 %v1830
        %2293 = vmatprep.subr.bf16.mxu0 %v1839
        %2294 = vmatpush1.bf16.msra.mxu0 %v1838
        %2295 = vmatprep.subr.bf16.mxu0 %v1847
        %2296 = vmatpush1.bf16.msra.mxu0 %v1846
        %2297 = vmatprep.subr.bf16.mxu0 %v1855
        %2298 = vmatpush1.bf16.msra.mxu0 %v1854
        %2299 = vmatprep.subr.bf16.mxu0 %v1863
        %2300 = vmatpush1.bf16.msra.mxu0 %v1862
        %2301 = vmatprep.subr.bf16.mxu0 %v1871
        %2302 = vmatpush1.bf16.msra.mxu0 %v1870
        %2303 = vmatprep.subr.bf16.mxu0 %v1879
        %2304 = vmatpush1.bf16.msra.mxu0 %v1878
        %2305 = vmatprep.subr.bf16.mxu0 0
        %2306 = vmatpush1.bf16.msra.mxu0 0
        %2307 = vmatprep.subr.bf16.mxu0 0
        %2308 = vmatpush1.bf16.msra.mxu0 0
        %2309 = vmatprep.subr.bf16.mxu0 0
        %2310 = vmatpush1.bf16.msra.mxu0 0
        %2311 = vmatprep.subr.bf16.mxu0 0
        %2312 = vmatpush1.bf16.msra.mxu0 0
        %2313 = vmatprep.subr.bf16.mxu0 0
        %2314 = vmatpush1.bf16.msra.mxu0 0
        %2315 = vmatprep.subr.bf16.mxu0 0
        %2316 = vmatpush1.bf16.msra.mxu0 0
        %2317 = vmatprep.subr.bf16.mxu0 0
        %2318 = vmatpush1.bf16.msra.mxu0 0
        %2319 = vmatprep.subr.bf16.mxu0 0
        %2320 = vmatpush1.bf16.msra.mxu0 0
        %2321 = vmatprep.mubr.bf16.mxu0 0
        %2322 = vmatmul.mubr.bf16.gmra.mrb[0].mxu0 %v921
        %v2323 = vpop.f32.mrb[0].mxu0
        %v2324 = vadd.f32 %v2281, %v2323
        %v2325 = vpop.f32.mrb[0].mxu0
        %v2326 = vadd.f32 %v2283, %v2325
        %v2327 = vpop.f32.mrb[0].mxu0
        %v2328 = vadd.f32 %v2285, %v2327
        %v2329 = vpop.f32.mrb[0].mxu0
        %v2330 = vadd.f32 %v2287, %v2329
        %2331 = vdwg.mxu0
        %2332 = vmatprep.subr.bf16.mxu0 %v1697
        %2333 = vmatpush1.bf16.msra.mxu0 %v1696
        %2334 = vmatprep.subr.bf16.mxu0 %v1705
        %2335 = vmatpush1.bf16.msra.mxu0 %v1704
        %2336 = vmatprep.subr.bf16.mxu0 %v1713
        %2337 = vmatpush1.bf16.msra.mxu0 %v1712
        %2338 = vmatprep.subr.bf16.mxu0 %v1721
        %2339 = vmatpush1.bf16.msra.mxu0 %v1720
        %2340 = vmatprep.subr.bf16.mxu0 %v1729
        %2341 = vmatpush1.bf16.msra.mxu0 %v1728
        %2342 = vmatprep.subr.bf16.mxu0 %v1737
        %2343 = vmatpush1.bf16.msra.mxu0 %v1736
        %2344 = vmatprep.subr.bf16.mxu0 %v1745
        %2345 = vmatpush1.bf16.msra.mxu0 %v1744
        %2346 = vmatprep.subr.bf16.mxu0 %v1753
        %2347 = vmatpush1.bf16.msra.mxu0 %v1752
        %2348 = vmatprep.subr.bf16.mxu0 %v1761
        %2349 = vmatpush1.bf16.msra.mxu0 %v1760
        %2350 = vmatprep.subr.bf16.mxu0 %v1769
        %2351 = vmatpush1.bf16.msra.mxu0 %v1768
        %2352 = vmatprep.subr.bf16.mxu0 %v1777
        %2353 = vmatpush1.bf16.msra.mxu0 %v1776
        %2354 = vmatprep.subr.bf16.mxu0 %v1785
        %2355 = vmatpush1.bf16.msra.mxu0 %v1784
        %2356 = vmatprep.subr.bf16.mxu0 %v1793
        %2357 = vmatpush1.bf16.msra.mxu0 %v1792
        %2358 = vmatprep.subr.bf16.mxu0 %v1801
        %2359 = vmatpush1.bf16.msra.mxu0 %v1800
        %2360 = vmatprep.subr.bf16.mxu0 %v1809
        %2361 = vmatpush1.bf16.msra.mxu0 %v1808
        %2362 = vmatprep.subr.bf16.mxu0 %v1817
        %2363 = vmatpush1.bf16.msra.mxu0 %v1816
        %2364 = vmatprep.mubr.bf16.mxu0 %v920
        %2365 = vmatmul.mubr.bf16.gmra.mrb[0].mxu0 %v919
        %v2366 = vpop.f32.mrb[0].mxu0
        %v2367 = vadd.f32 0.0, %v2366
        %v2368 = vpop.f32.mrb[0].mxu0
        %v2369 = vadd.f32 0.0, %v2368
        %v2370 = vpop.f32.mrb[0].mxu0
        %v2371 = vadd.f32 0.0, %v2370
        %v2372 = vpop.f32.mrb[0].mxu0
        %v2373 = vadd.f32 0.0, %v2372
        %2374 = vdwg.mxu0
        %2375 = vmatprep.subr.bf16.mxu0 %v1825
        %2376 = vmatpush1.bf16.msra.mxu0 %v1824
        %2377 = vmatprep.subr.bf16.mxu0 %v1833
        %2378 = vmatpush1.bf16.msra.mxu0 %v1832
        %2379 = vmatprep.subr.bf16.mxu0 %v1841
        %2380 = vmatpush1.bf16.msra.mxu0 %v1840
        %2381 = vmatprep.subr.bf16.mxu0 %v1849
        %2382 = vmatpush1.bf16.msra.mxu0 %v1848
        %2383 = vmatprep.subr.bf16.mxu0 %v1857
        %2384 = vmatpush1.bf16.msra.mxu0 %v1856
        %2385 = vmatprep.subr.bf16.mxu0 %v1865
        %2386 = vmatpush1.bf16.msra.mxu0 %v1864
        %2387 = vmatprep.subr.bf16.mxu0 %v1873
        %2388 = vmatpush1.bf16.msra.mxu0 %v1872
        %2389 = vmatprep.subr.bf16.mxu0 %v1881
        %2390 = vmatpush1.bf16.msra.mxu0 %v1880
        %2391 = vmatprep.subr.bf16.mxu0 0
        %2392 = vmatpush1.bf16.msra.mxu0 0
        %2393 = vmatprep.subr.bf16.mxu0 0
        %2394 = vmatpush1.bf16.msra.mxu0 0
        %2395 = vmatprep.subr.bf16.mxu0 0
        %2396 = vmatpush1.bf16.msra.mxu0 0
        %2397 = vmatprep.subr.bf16.mxu0 0
        %2398 = vmatpush1.bf16.msra.mxu0 0
        %2399 = vmatprep.subr.bf16.mxu0 0
        %2400 = vmatpush1.bf16.msra.mxu0 0
        %2401 = vmatprep.subr.bf16.mxu0 0
        %2402 = vmatpush1.bf16.msra.mxu0 0
        %2403 = vmatprep.subr.bf16.mxu0 0
        %2404 = vmatpush1.bf16.msra.mxu0 0
        %2405 = vmatprep.subr.bf16.mxu0 0
        %2406 = vmatpush1.bf16.msra.mxu0 0
        %2407 = vmatprep.mubr.bf16.mxu0 0
        %2408 = vmatmul.mubr.bf16.gmra.mrb[0].mxu0 %v921
        %v2409 = vpop.f32.mrb[0].mxu0
        %v2410 = vadd.f32 %v2367, %v2409
        %v2411 = vpop.f32.mrb[0].mxu0
        %v2412 = vadd.f32 %v2369, %v2411
        %v2413 = vpop.f32.mrb[0].mxu0
        %v2414 = vadd.f32 %v2371, %v2413
        %v2415 = vpop.f32.mrb[0].mxu0
        %v2416 = vadd.f32 %v2373, %v2415
        %2417 = vdwg.mxu0
        %v2418 = vmax.f32 %v2152, %v2238
        %v2419 = vmax.f32 %v2154, %v2240
        %v2420 = vmax.f32 %v2156, %v2242
        %v2421 = vmax.f32 %v2158, %v2244
        %v2422 = vmax.f32 %v2324, %v2410
        %v2423 = vmax.f32 %v2326, %v2412
        %v2424 = vmax.f32 %v2328, %v2414
        %v2425 = vmax.f32 %v2330, %v2416
        %v2426 = vmax.f32 %v2418, %v2422
        %v2427 = vmax.f32 %v2419, %v2423
        %v2428 = vmax.f32 %v2420, %v2424
        %v2429 = vmax.f32 %v2421, %v2425
        %v2430 = vld [vmem:[%s4] sm:$0x3]
        %v2432 = vlaneseq
        %v2433 = vshrl.u32 %v2432, 7
        %v2434 = vsub.s32 0, %v2433
        %v2435 = vrot.slane %v2430, %v2434
        %v2436 = vlaneseq
        %v2437 = vshrl.u32 %v2436, 7
        %v2438 = vsub.s32 1, %v2437
        %v2439 = vrot.slane %v2430, %v2438
        %v2442 = vadd.f32 %v2426, %v2435
        %v2443 = vadd.f32 %v2427, %v2439
        %v2444 = vadd.f32 %v2428, %v2435
        %v2445 = vadd.f32 %v2429, %v2439
        %v2446 = vmul.f32 %v2442, 0.01
        %v2447 = vmul.f32 %v2443, 0.01
        %v2448 = vmul.f32 %v2444, 0.01
        %v2449 = vmul.f32 %v2445, 0.01
        %v2450 = vmax.f32 %v2442, %v2446
        %v2451 = vmax.f32 %v2443, %v2447
        %v2452 = vmax.f32 %v2444, %v2448
        %v2453 = vmax.f32 %v2445, %v2449
        %v2454 = vpack.c.bf16 %v2452, %v2450
        %v2455 = vpack.c.bf16 %v2453, %v2451
        %v2456 = vld [vmem:[#allocation6] sm:$0xf]
        %v2457 = vld [vmem:[#allocation6 + $0x4] sm:$0xf]
        %v2458 = vld [vmem:[#allocation6 + $0x8] sm:$0xf]
        %v2459 = vld [vmem:[#allocation6 + $0xc] sm:$0xf]
        %v2460 = vld [vmem:[#allocation6 + $0x10] sm:$0xf]
        %v2461 = vld [vmem:[#allocation6 + $0x14] sm:$0xf]
        %v2462 = vld [vmem:[#allocation6 + $0x18] sm:$0xf]
        %v2463 = vld [vmem:[#allocation6 + $0x1c] sm:$0xf]
        %v2464 = vld [vmem:[#allocation6 + $0x20] sm:$0xf]
        %v2465 = vld [vmem:[#allocation6 + $0x24] sm:$0xf]
        %v2466 = vld [vmem:[#allocation6 + $0x28] sm:$0xf]
        %v2467 = vld [vmem:[#allocation6 + $0x2c] sm:$0xf]
        %v2468 = vld [vmem:[#allocation6 + $0x30] sm:$0xf]
        %v2469 = vld [vmem:[#allocation6 + $0x34] sm:$0xf]
        %v2470 = vld [vmem:[#allocation6 + $0x38] sm:$0xf]
        %v2471 = vld [vmem:[#allocation6 + $0x3c] sm:$0xf]
        %v2472 = vld [vmem:[#allocation6 + $0x40] sm:$0xf]
        %v2473 = vld [vmem:[#allocation6 + $0x44] sm:$0xf]
        %v2474 = vld [vmem:[#allocation6 + $0x48] sm:$0xf]
        %v2475 = vld [vmem:[#allocation6 + $0x4c] sm:$0xf]
        %v2476 = vld [vmem:[#allocation6 + $0x50] sm:$0xf]
        %v2477 = vld [vmem:[#allocation6 + $0x54] sm:$0xf]
        %v2478 = vld [vmem:[#allocation6 + $0x58] sm:$0xf]
        %v2479 = vld [vmem:[#allocation6 + $0x5c] sm:$0xf]
        %v2480 = vld [vmem:[#allocation6 + $0x60] sm:$0xf]
        %v2481 = vld [vmem:[#allocation6 + $0x64] sm:$0xf]
        %v2482 = vld [vmem:[#allocation6 + $0x68] sm:$0xf]
        %v2483 = vld [vmem:[#allocation6 + $0x6c] sm:$0xf]
        %v2484 = vld [vmem:[#allocation6 + $0x70] sm:$0xf]
        %v2485 = vld [vmem:[#allocation6 + $0x74] sm:$0xf]
        %v2486 = vld [vmem:[#allocation6 + $0x78] sm:$0xf]
        %v2487 = vld [vmem:[#allocation6 + $0x7c] sm:$0xf]
        %v2488 = vld [vmem:[%s6] sm:$0x1]
        %v2490 = vlaneseq
        %v2491 = vshrl.u32 %v2490, 7
        %v2492 = vsub.s32 0, %v2491
        %v2493 = vrot.slane %v2488, %v2492
        %v2527 = vunpack.c.l.b16 %v2456
        %v2528 = vunpack.c.l.b16 %v2457
        %v2529 = vunpack.c.l.b16 %v2458
        %v2530 = vunpack.c.l.b16 %v2459
        %v2531 = vunpack.c.l.b16 %v2460
        %v2532 = vunpack.c.l.b16 %v2461
        %v2533 = vunpack.c.l.b16 %v2462
        %v2534 = vunpack.c.l.b16 %v2463
        %v2535 = vunpack.c.l.b16 %v2464
        %v2536 = vunpack.c.l.b16 %v2465
        %v2537 = vunpack.c.l.b16 %v2466
        %v2538 = vunpack.c.l.b16 %v2467
        %v2539 = vunpack.c.l.b16 %v2468
        %v2540 = vunpack.c.l.b16 %v2469
        %v2541 = vunpack.c.l.b16 %v2470
        %v2542 = vunpack.c.l.b16 %v2471
        %v2543 = vunpack.c.l.b16 %v2472
        %v2544 = vunpack.c.l.b16 %v2473
        %v2545 = vunpack.c.l.b16 %v2474
        %v2546 = vunpack.c.l.b16 %v2475
        %v2547 = vunpack.c.l.b16 %v2476
        %v2548 = vunpack.c.l.b16 %v2477
        %v2549 = vunpack.c.l.b16 %v2478
        %v2550 = vunpack.c.l.b16 %v2479
        %v2551 = vunpack.c.l.b16 %v2480
        %v2552 = vunpack.c.l.b16 %v2481
        %v2553 = vunpack.c.l.b16 %v2482
        %v2554 = vunpack.c.l.b16 %v2483
        %v2555 = vunpack.c.l.b16 %v2484
        %v2556 = vunpack.c.l.b16 %v2485
        %v2557 = vunpack.c.l.b16 %v2486
        %v2558 = vunpack.c.l.b16 %v2487
        %v2559 = vpack.c.b16 %v2528, %v2527
        %v2560 = vpack.c.b16 %v2530, %v2529
        %v2561 = vpack.c.b16 %v2532, %v2531
        %v2562 = vpack.c.b16 %v2534, %v2533
        %v2563 = vpack.c.b16 %v2536, %v2535
        %v2564 = vpack.c.b16 %v2538, %v2537
        %v2565 = vpack.c.b16 %v2540, %v2539
        %v2566 = vpack.c.b16 %v2542, %v2541
        %v2567 = vpack.c.b16 %v2544, %v2543
        %v2568 = vpack.c.b16 %v2546, %v2545
        %v2569 = vpack.c.b16 %v2548, %v2547
        %v2570 = vpack.c.b16 %v2550, %v2549
        %v2571 = vpack.c.b16 %v2552, %v2551
        %v2572 = vpack.c.b16 %v2554, %v2553
        %v2573 = vpack.c.b16 %v2556, %v2555
        %v2574 = vpack.c.b16 %v2558, %v2557
        %2591 = vmatprep.subr.bf16.mxu0 0
        %2592 = vmatpush1.bf16.msra.mxu0 %v2559
        %2593 = vmatprep.subr.bf16.mxu0 0
        %2594 = vmatpush1.bf16.msra.mxu0 %v2560
        %2595 = vmatprep.subr.bf16.mxu0 0
        %2596 = vmatpush1.bf16.msra.mxu0 %v2561
        %2597 = vmatprep.subr.bf16.mxu0 0
        %2598 = vmatpush1.bf16.msra.mxu0 %v2562
        %2599 = vmatprep.subr.bf16.mxu0 0
        %2600 = vmatpush1.bf16.msra.mxu0 %v2563
        %2601 = vmatprep.subr.bf16.mxu0 0
        %2602 = vmatpush1.bf16.msra.mxu0 %v2564
        %2603 = vmatprep.subr.bf16.mxu0 0
        %2604 = vmatpush1.bf16.msra.mxu0 %v2565
        %2605 = vmatprep.subr.bf16.mxu0 0
        %2606 = vmatpush1.bf16.msra.mxu0 %v2566
        %2607 = vmatprep.subr.bf16.mxu0 0
        %2608 = vmatpush1.bf16.msra.mxu0 %v2567
        %2609 = vmatprep.subr.bf16.mxu0 0
        %2610 = vmatpush1.bf16.msra.mxu0 %v2568
        %2611 = vmatprep.subr.bf16.mxu0 0
        %2612 = vmatpush1.bf16.msra.mxu0 %v2569
        %2613 = vmatprep.subr.bf16.mxu0 0
        %2614 = vmatpush1.bf16.msra.mxu0 %v2570
        %2615 = vmatprep.subr.bf16.mxu0 0
        %2616 = vmatpush1.bf16.msra.mxu0 %v2571
        %2617 = vmatprep.subr.bf16.mxu0 0
        %2618 = vmatpush1.bf16.msra.mxu0 %v2572
        %2619 = vmatprep.subr.bf16.mxu0 0
        %2620 = vmatpush1.bf16.msra.mxu0 %v2573
        %2621 = vmatprep.subr.bf16.mxu0 0
        %2622 = vmatpush1.bf16.msra.mxu0 %v2574
        %2623 = vmatprep.mubr.bf16.mxu0 %v2455
        %2624 = vmatmul.mubr.bf16.gmra.mrb[0].mxu0 %v2454
        %v2625 = vpop.f32.mrb[0].mxu0
        %v2626 = vadd.f32 %v2493, %v2625
        %v2627 = vpop.f32.mrb[0].mxu0
        %v2628 = vpop.f32.mrb[0].mxu0
        %v2629 = vadd.f32 %v2493, %v2628
        %v2630 = vpop.f32.mrb[0].mxu0
        %2631 = vdwg.mxu0
        %v2632 = vmax.f32 %v2626, 0.0
        %v2633 = vmax.f32 %v2629, 0.0
        %v2634 = vpack.c.bf16 %v2633, %v2632
        %v2635 = vld [vmem:[%s7] sm:$0xf]
        %v2636 = vld [vmem:[%s7 + $0x4] sm:$0xf]
        %v2637 = vld [vmem:[%s7 + $0x8] sm:$0xf]
        %v2638 = vld [vmem:[%s7 + $0xc] sm:$0xf]
        %v2639 = vld [vmem:[%s7 + $0x10] sm:$0xf]
        %v2640 = vld [vmem:[%s7 + $0x14] sm:$0xf]
        %v2641 = vld [vmem:[%s7 + $0x18] sm:$0xf]
        %v2642 = vld [vmem:[%s7 + $0x1c] sm:$0xf]
        %v2643 = vld [vmem:[%s7 + $0x20] sm:$0xf]
        %v2644 = vld [vmem:[%s7 + $0x24] sm:$0xf]
        %v2645 = vld [vmem:[%s7 + $0x28] sm:$0xf]
        %v2646 = vld [vmem:[%s7 + $0x2c] sm:$0xf]
        %v2647 = vld [vmem:[%s7 + $0x30] sm:$0xf]
        %v2648 = vld [vmem:[%s7 + $0x34] sm:$0xf]
        %v2649 = vld [vmem:[%s7 + $0x38] sm:$0xf]
        %v2650 = vld [vmem:[%s7 + $0x3c] sm:$0xf]
        %v2651 = vld [vmem:[%s8] sm:$0x1]
        %v2653 = vlaneseq
        %v2654 = vshrl.u32 %v2653, 7
        %v2655 = vsub.s32 0, %v2654
        %v2656 = vrot.slane %v2651, %v2655
        %v2674 = vunpack.c.l.b16 %v2635
        %v2675 = vunpack.c.l.b16 %v2636
        %v2676 = vunpack.c.l.b16 %v2637
        %v2677 = vunpack.c.l.b16 %v2638
        %v2678 = vunpack.c.l.b16 %v2639
        %v2679 = vunpack.c.l.b16 %v2640
        %v2680 = vunpack.c.l.b16 %v2641
        %v2681 = vunpack.c.l.b16 %v2642
        %v2682 = vunpack.c.l.b16 %v2643
        %v2683 = vunpack.c.l.b16 %v2644
        %v2684 = vunpack.c.l.b16 %v2645
        %v2685 = vunpack.c.l.b16 %v2646
        %v2686 = vunpack.c.l.b16 %v2647
        %v2687 = vunpack.c.l.b16 %v2648
        %v2688 = vunpack.c.l.b16 %v2649
        %v2689 = vunpack.c.l.b16 %v2650
        %v2690 = vpack.c.b16 %v2675, %v2674
        %v2691 = vpack.c.b16 %v2677, %v2676
        %v2692 = vpack.c.b16 %v2679, %v2678
        %v2693 = vpack.c.b16 %v2681, %v2680
        %v2694 = vpack.c.b16 %v2683, %v2682
        %v2695 = vpack.c.b16 %v2685, %v2684
        %v2696 = vpack.c.b16 %v2687, %v2686
        %v2697 = vpack.c.b16 %v2689, %v2688
        %2706 = vmatprep.subr.bf16.mxu0 0
        %2707 = vmatpush1.bf16.msra.mxu0 %v2690
        %2708 = vmatprep.subr.bf16.mxu0 0
        %2709 = vmatpush1.bf16.msra.mxu0 %v2691
        %2710 = vmatprep.subr.bf16.mxu0 0
        %2711 = vmatpush1.bf16.msra.mxu0 %v2692
        %2712 = vmatprep.subr.bf16.mxu0 0
        %2713 = vmatpush1.bf16.msra.mxu0 %v2693
        %2714 = vmatprep.subr.bf16.mxu0 0
        %2715 = vmatpush1.bf16.msra.mxu0 %v2694
        %2716 = vmatprep.subr.bf16.mxu0 0
        %2717 = vmatpush1.bf16.msra.mxu0 %v2695
        %2718 = vmatprep.subr.bf16.mxu0 0
        %2719 = vmatpush1.bf16.msra.mxu0 %v2696
        %2720 = vmatprep.subr.bf16.mxu0 0
        %2721 = vmatpush1.bf16.msra.mxu0 %v2697
        %2722 = vmatprep.subr.bf16.mxu0 0
        %2723 = vmatpush1.bf16.msra.mxu0 0
        %2724 = vmatprep.subr.bf16.mxu0 0
        %2725 = vmatpush1.bf16.msra.mxu0 0
        %2726 = vmatprep.subr.bf16.mxu0 0
        %2727 = vmatpush1.bf16.msra.mxu0 0
        %2728 = vmatprep.subr.bf16.mxu0 0
        %2729 = vmatpush1.bf16.msra.mxu0 0
        %2730 = vmatprep.subr.bf16.mxu0 0
        %2731 = vmatpush1.bf16.msra.mxu0 0
        %2732 = vmatprep.subr.bf16.mxu0 0
        %2733 = vmatpush1.bf16.msra.mxu0 0
        %2734 = vmatprep.subr.bf16.mxu0 0
        %2735 = vmatpush1.bf16.msra.mxu0 0
        %2736 = vmatprep.subr.bf16.mxu0 0
        %2737 = vmatpush1.bf16.msra.mxu0 0
        %2738 = vmatprep.mubr.bf16.mxu0 0
        %2739 = vmatmul.mubr.bf16.gmra.mrb[0].mxu0 %v2634
        %v2740 = vpop.f32.mrb[0].mxu0
        %v2741 = vadd.f32 %v2656, %v2740
        %v2742 = vpop.f32.mrb[0].mxu0
        %v2743 = vpop.f32.mrb[0].mxu0
        %v2744 = vadd.f32 %v2656, %v2743
        %v2745 = vpop.f32.mrb[0].mxu0
        %2746 = vdwg.mxu0
        %vm2747 = vcmask 64512
        %2748 = vst.msk [vmem:[%s378] sm:$0xff] %vm2747, %v2741
        %2749 = vst.msk [vmem:[%s378 + $0x8] sm:$0xff] %vm2747, %v2744
        %s2750 = smul.u32 2, %s22
        %p2751 = scmp.lt.s32.totalorder %s2750, 3
        %s2752 = scalar_select %p2751, %s2750, 3
        %s2753 = smul.addr %s2752, 8
        %s2754 = scalar_lea.vmem %s9, %s2753
        // Predicated region
        $region69: #{tpu_custom_call.1} parent=55 // pred_check
          %p2755 = pneg %p234
        $region70: #{tpu_custom_call.1} parent=55 // pred_check_branch
          %2757 = sbr.rel (%p2755) target = $region72
        $region71: #{tpu_custom_call.1} parent=55 // pred_region
          %s2758 = smul.u32 2, %s22
        $region72: #{tpu_custom_call.1} parent=55 // pred_fallthru
          _
      $region56: #{tpu_custom_call.1} parent=5 // pred_fallthru
        _
      %p2759 = scmp.le.s32.totalorder 2, %s17
      // Predicated region
      $region73: #{tpu_custom_call.1} parent=5 // pred_check
        %p2760 = pneg %p2759
      $region74: #{tpu_custom_call.1} parent=5 // pred_check_branch
        %2762 = sbr.rel (%p2760) target = $region76
      $region75: #{tpu_custom_call.1} parent=5 // pred_region
        %s2763 = ssub.s32 %s17, 2
        // Predicated region
        $region77: #{tpu_custom_call.1} parent=75 // pred_check
          %p2764 = pneg %p240
        $region78: #{tpu_custom_call.1} parent=75 // pred_check_branch
          %2766 = sbr.rel (%p2764) target = $region80
        $region79: #{tpu_custom_call.1} parent=75 // pred_region
          %s2767 = smul.u32 2, %s23
          %p2768 = scmp.lt.s32.totalorder %s2767, 3
          %s2769 = scalar_select %p2768, %s2767, 3
          %s2770 = smul.addr %s2769, 8
          %s2771 = scalar_lea.vmem %s9, %s2770
        $region80: #{tpu_custom_call.1} parent=75 // pred_fallthru
          _
      $region76: #{tpu_custom_call.1} parent=5 // pred_fallthru
        _
    $region6: #{tpu_custom_call.1} parent=1 // loop_footer
      %s21 = sadd.s32 1, %s17
    $region7: #{tpu_custom_call.1} parent=1 // loop_footer_branch
      %16 = sbr.rel target = $region3
    $region8: #{tpu_custom_call.1} parent=1 // loop_exit
      _
    %2772 = vsyncpa [#allocation3], 1
    %s2773 = scalar_lea.sflag [#allocation3], 1
    %2774 = vsyncpa %s2773, 1
    %2775 = vsyncpa [#allocation5], 1

</llo_original>
